<compile_context>
chip_gen: v7x
topology: tpu7x:2x2x1
jax: 0.10.0
libtpu: 0.0.40
codegen_flags: <defaults>
</compile_context>

<pallas_src>
import math

import jax
import jax.numpy as jnp
from jax.experimental import pallas as pl
from jax.experimental.pallas import tpu as pltpu

_MAX_BATCH_TILE = 8192


def mlp_q_kernel(x_ref,
                 w1_ref, b1_ref,
                 w2_ref, b2_ref,
                 w3_ref, b3_ref,
                 w4_ref, b4_ref,
                 o_ref):
    """Fused 4-layer MLP: 3x (matmul + bias + tanh) plus a linear Q head.

    Matmuls run on the MXU in the weight dtype (bf16 or f32) with f32
    accumulation; bias-add / tanh happen on the f32 accumulator and are only
    downcast when feeding the next matmul's LHS.
    """
    cdt = w1_ref.dtype  # matmul operand dtype (bf16 by default)

    # x arrives as float32; cast on the VPU (plenty of slack) instead of a
    # separate wrapper-side cast HLO that would round-trip HBM.
    x = x_ref[...].astype(cdt)

    h = jnp.dot(x, w1_ref[...], preferred_element_type=jnp.float32) + b1_ref[...]
    h = jnp.tanh(h).astype(cdt)

    h = jnp.dot(h, w2_ref[...], preferred_element_type=jnp.float32) + b2_ref[...]
    h = jnp.tanh(h).astype(cdt)

    h = jnp.dot(h, w3_ref[...], preferred_element_type=jnp.float32) + b3_ref[...]
    h = jnp.tanh(h).astype(cdt)

    # Q head: identity activation, single output column, unpadded store.
    q = jnp.dot(h, w4_ref[...], preferred_element_type=jnp.float32) + b4_ref[...]
    o_ref[...] = q.astype(o_ref.dtype)


def _round_up(x, m):
    return -(-x // m) * m


def _pick_batch_tile(batch):
    """Largest useful batch tile.

    Weights are VMEM-resident and the x-tile DMA is tiny, so grid=1 is optimal
    for small/medium batches; for huge batches, 8192-row tiles amortize the
    ~600-cycle per-grid-step overhead. Never degrades to tiny tiles.
    """
    if batch <= _MAX_BATCH_TILE:
        return max(8, _round_up(batch, 8))
    return _MAX_BATCH_TILE


def prepare_mlp_q_params(params, *, use_bf16=True):
    """One-time conversion to kernel-ready params: weights in the matmul dtype
    (bf16 by default -> native MXU rate, half the HBM bytes), biases float32
    (added to the f32 accumulator). Do this once, outside the training step,
    so the per-call graph is just the pallas_call."""
    wdt = jnp.bfloat16 if use_bf16 else jnp.float32
    out = {}
    for i in range(1, 5):
        out[f"w{i}"] = params[f"w{i}"].astype(wdt)
        out[f"b{i}"] = params[f"b{i}"].astype(jnp.float32)
    return out


def mlp_q_forward(x, kparams, *, batch_tile=None):
    """x: (B, obs_dim) float32. kparams: output of prepare_mlp_q_params.

    Returns q with shape (B, 1), matching MLPQFunction.forward.
    """
    B, obs_dim = x.shape
    hidden = kparams["w1"].shape[1]
    out_dim = kparams["w4"].shape[1]  # = 1 for MLPQFunction

    if batch_tile is None:
        batch_tile = _pick_batch_tile(B)
    batch_tile = max(8, _round_up(batch_tile, 8))

    # Ragged batches: pad up to one tile instead of shrinking the tile.
    B_pad = _round_up(B, batch_tile)
    if B_pad != B:
        x = jnp.pad(x, ((0, B_pad - B), (0, 0)))
    grid = (B_pad // batch_tile,)

    w1, b1 = kparams["w1"], kparams["b1"]
    w2, b2 = kparams["w2"], kparams["b2"]
    w3, b3 = kparams["w3"], kparams["b3"]
    w4, b4 = kparams["w4"], kparams["b4"]

    def const_spec(a):
        # Same block index at every grid step -> stays VMEM-resident, no re-DMA.
        return pl.BlockSpec(a.shape, lambda i: (0,) * a.ndim)

    in_specs = [
        pl.BlockSpec((batch_tile, obs_dim), lambda i: (i, 0)),  # x tile
        const_spec(w1), const_spec(b1),
        const_spec(w2), const_spec(b2),
        const_spec(w3), const_spec(b3),
        const_spec(w4), const_spec(b4),
    ]
    # Unpadded (batch_tile, 1) output: last dim equals the full array dim (legal)
    # and avoids 128x write amplification + the wrapper-side slice re-read.
    out_spec = pl.BlockSpec((batch_tile, out_dim), lambda i: (i, 0))

    w_itemsize = jnp.dtype(w1.dtype).itemsize
    weight_bytes = (w1.size + w2.size + w3.size + w4.size) * w_itemsize
    bias_bytes = (b1.size + b2.size + b3.size + b4.size) * 4
    x_tile_bytes = batch_tile * obs_dim * 4
    out_tile_bytes = batch_tile * out_dim * 4

    flops = 2 * B_pad * (obs_dim * hidden + 2 * hidden * hidden + hidden * out_dim)
    transcendentals = 3 * B_pad * hidden
    bytes_accessed = (B_pad * obs_dim * 4            # x read (f32, cast in-kernel)
                      + B_pad * out_dim * 4          # q write (unpadded)
                      + weight_bytes + bias_bytes)

    # VMEM bound from actual buffers: double-buffered x/out tiles + resident
    # weights/biases, with slack; clamped to [4 MiB, 32 MiB] (safe on v7x too).
    vmem_needed = 2 * (x_tile_bytes + out_tile_bytes) + 2 * (weight_bytes + bias_bytes)
    vmem_limit = min(max(2 * vmem_needed + (1 << 20), 4 << 20), 32 << 20)

    # TODO(synk): on v7x, shard a leading size-2 batch grid axis with
    # pltpu.CORE_PARALLEL (or pl.core_map) to engage both TensorCores;
    # plain "parallel" does not change codegen on its own.
    out = pl.pallas_call(
        mlp_q_kernel,
        out_shape=jax.ShapeDtypeStruct((B_pad, out_dim), jnp.float32),
        grid=grid,
        in_specs=in_specs,
        out_specs=out_spec,
        compiler_params=pltpu.CompilerParams(
            dimension_semantics=("parallel",),
            vmem_limit_bytes=vmem_limit),
        cost_estimate=pl.CostEstimate(
            flops=flops,
            transcendentals=transcendentals,
            bytes_accessed=bytes_accessed),
    )(x, w1, b1, w2, b2, w3, b3, w4, b4)

    if B_pad != B:
        out = out[:B]
    return out  # (B, 1)


def init_mlp_q_params(key, obs_dim, hidden=64, out_dim=1):
    """nn.Linear-style init: U(-1/sqrt(fan_in), 1/sqrt(fan_in)) for W and b.

    Weights stored (in_features, out_features) -- transposed vs. PyTorch --
    so the kernel can do x @ W directly.
    """
    dims = [(obs_dim, hidden), (hidden, hidden), (hidden, hidden), (hidden, out_dim)]
    params = {}
    for idx, (fan_in, fan_out) in enumerate(dims, start=1):
        key, kw, kb = jax.random.split(key, 3)
        bound = 1.0 / math.sqrt(fan_in)
        params[f"w{idx}"] = jax.random.uniform(
            kw, (fan_in, fan_out), jnp.float32, minval=-bound, maxval=bound)
        params[f"b{idx}"] = jax.random.uniform(
            kb, (1, fan_out), jnp.float32, minval=-bound, maxval=bound)
    return params


if __name__ == "__main__":
    key = jax.random.PRNGKey(0)
    batch, obs_dim = 256, 16

    key, kx, kp = jax.random.split(key, 3)
    x = jax.random.normal(kx, (batch, obs_dim), jnp.float32)
    params = init_mlp_q_params(kp, obs_dim)

    # Pure-JAX float32 reference of the exact MLPQFunction math.
    def ref_forward(x, p):
        h = jnp.tanh(x @ p["w1"] + p["b1"])
        h = jnp.tanh(h @ p["w2"] + p["b2"])
        h = jnp.tanh(h @ p["w3"] + p["b3"])
        return h @ p["w4"] + p["b4"]       # no tanh on the Q head

    ref = ref_forward(x, params)

    # Float32 kernel path: tight correctness check.
    kp_f32 = prepare_mlp_q_params(params, use_bf16=False)
    q_f32 = jax.block_until_ready(mlp_q_forward(x, kp_f32))
    assert q_f32.shape == (batch, 1)
    assert jnp.allclose(q_f32, ref, atol=1e-4, rtol=1e-4)

    # Default bf16 kernel path: loose check against the f32 reference.
    kp_bf16 = prepare_mlp_q_params(params, use_bf16=True)
    q_bf16 = jax.block_until_ready(mlp_q_forward(x, kp_bf16))
    assert q_bf16.shape == (batch, 1)
    assert jnp.allclose(q_bf16, ref, atol=5e-2, rtol=5e-2)

    # Ragged batch exercises the pad-to-tile path (no tiny-tile degradation,
    # no divisibility assert).
    xr = x[:37]
    q_r = jax.block_until_ready(mlp_q_forward(xr, kp_f32))
    assert q_r.shape == (37, 1)
    assert jnp.allclose(q_r, ref[:37], atol=1e-4, rtol=1e-4)

    print("KERNEL_OK")
</pallas_src>

<mosaic_0001>
module attributes {stable_mosaic.version = 11 : i64} {
  func.func @mlp_q_kernel(%arg0: i32, %arg1: memref<256x16xf32, #tpu.memory_space<vmem>>, %arg2: memref<16x64xf32, #tpu.memory_space<vmem>>, %arg3: memref<1x64xf32, #tpu.memory_space<vmem>>, %arg4: memref<64x64xf32, #tpu.memory_space<vmem>>, %arg5: memref<1x64xf32, #tpu.memory_space<vmem>>, %arg6: memref<64x64xf32, #tpu.memory_space<vmem>>, %arg7: memref<1x64xf32, #tpu.memory_space<vmem>>, %arg8: memref<64x1xf32, #tpu.memory_space<vmem>>, %arg9: memref<1x1xf32, #tpu.memory_space<vmem>>, %arg10: memref<256x1xf32, #tpu.memory_space<vmem>>) attributes {dimension_semantics = [#tpu.dimension_semantics<parallel>], iteration_bounds = array<i64: 1>, scalar_prefetch = 0 : i64, scratch_operands = 0 : i64, tpu.core_type = #tpu.core_type<tc>, window_params = [{transform_indices = @transform_0, window_bounds = array<i64: 256, 16>}, {pipeline_mode = #tpu.pipeline_mode<synchronous>, transform_indices = @transform_1, window_bounds = array<i64: 16, 64>}, {pipeline_mode = #tpu.pipeline_mode<synchronous>, transform_indices = @transform_2, window_bounds = array<i64: 1, 64>}, {pipeline_mode = #tpu.pipeline_mode<synchronous>, transform_indices = @transform_3, window_bounds = array<i64: 64, 64>}, {pipeline_mode = #tpu.pipeline_mode<synchronous>, transform_indices = @transform_4, window_bounds = array<i64: 1, 64>}, {pipeline_mode = #tpu.pipeline_mode<synchronous>, transform_indices = @transform_5, window_bounds = array<i64: 64, 64>}, {pipeline_mode = #tpu.pipeline_mode<synchronous>, transform_indices = @transform_6, window_bounds = array<i64: 1, 64>}, {pipeline_mode = #tpu.pipeline_mode<synchronous>, transform_indices = @transform_7, window_bounds = array<i64: 64, 1>}, {pipeline_mode = #tpu.pipeline_mode<synchronous>, transform_indices = @transform_8, window_bounds = array<i64: 1, 1>}, {transform_indices = @transform_9, window_bounds = array<i64: 256, 1>}]} {
    %c0 = arith.constant 0 : index
    %c0_0 = arith.constant 0 : index
    %0 = vector.load %arg1[%c0, %c0_0] : memref<256x16xf32, #tpu.memory_space<vmem>>, vector<256x16xf32>
    %c0_1 = arith.constant 0 : index
    %c0_2 = arith.constant 0 : index
    %1 = vector.load %arg2[%c0_1, %c0_2] : memref<16x64xf32, #tpu.memory_space<vmem>>, vector<16x64xf32>
    %cst = arith.constant dense<0.000000e+00> : vector<256x64xf32>
    %2 = tpu.matmul %0, %1, %cst {dimension_numbers = #tpu.dot_dimension_numbers<[1], [0], [0], [1], [0, 0, 1, 1], [], []>} : vector<256x16xf32>, vector<16x64xf32>, vector<256x64xf32> -> vector<256x64xf32>
    %c0_3 = arith.constant 0 : index
    %c0_4 = arith.constant 0 : index
    %3 = vector.load %arg3[%c0_3, %c0_4] : memref<1x64xf32, #tpu.memory_space<vmem>>, vector<1x64xf32>
    %4 = vector.broadcast %3 : vector<1x64xf32> to vector<256x64xf32>
    %5 = arith.addf %2, %4 : vector<256x64xf32>
    %6 = math.tanh %5 : vector<256x64xf32>
    %c0_5 = arith.constant 0 : index
    %c0_6 = arith.constant 0 : index
    %7 = vector.load %arg4[%c0_5, %c0_6] : memref<64x64xf32, #tpu.memory_space<vmem>>, vector<64x64xf32>
    %cst_7 = arith.constant dense<0.000000e+00> : vector<256x64xf32>
    %8 = tpu.matmul %6, %7, %cst_7 {dimension_numbers = #tpu.dot_dimension_numbers<[1], [0], [0], [1], [0, 0, 1, 1], [], []>} : vector<256x64xf32>, vector<64x64xf32>, vector<256x64xf32> -> vector<256x64xf32>
    %c0_8 = arith.constant 0 : index
    %c0_9 = arith.constant 0 : index
    %9 = vector.load %arg5[%c0_8, %c0_9] : memref<1x64xf32, #tpu.memory_space<vmem>>, vector<1x64xf32>
    %10 = vector.broadcast %9 : vector<1x64xf32> to vector<256x64xf32>
    %11 = arith.addf %8, %10 : vector<256x64xf32>
    %12 = math.tanh %11 : vector<256x64xf32>
    %c0_10 = arith.constant 0 : index
    %c0_11 = arith.constant 0 : index
    %13 = vector.load %arg6[%c0_10, %c0_11] : memref<64x64xf32, #tpu.memory_space<vmem>>, vector<64x64xf32>
    %cst_12 = arith.constant dense<0.000000e+00> : vector<256x64xf32>
    %14 = tpu.matmul %12, %13, %cst_12 {dimension_numbers = #tpu.dot_dimension_numbers<[1], [0], [0], [1], [0, 0, 1, 1], [], []>} : vector<256x64xf32>, vector<64x64xf32>, vector<256x64xf32> -> vector<256x64xf32>
    %c0_13 = arith.constant 0 : index
    %c0_14 = arith.constant 0 : index
    %15 = vector.load %arg7[%c0_13, %c0_14] : memref<1x64xf32, #tpu.memory_space<vmem>>, vector<1x64xf32>
    %16 = vector.broadcast %15 : vector<1x64xf32> to vector<256x64xf32>
    %17 = arith.addf %14, %16 : vector<256x64xf32>
    %18 = math.tanh %17 : vector<256x64xf32>
    %c0_15 = arith.constant 0 : index
    %c0_16 = arith.constant 0 : index
    %19 = vector.load %arg8[%c0_15, %c0_16] : memref<64x1xf32, #tpu.memory_space<vmem>>, vector<64x1xf32>
    %cst_17 = arith.constant dense<0.000000e+00> : vector<256x1xf32>
    %20 = tpu.matmul %18, %19, %cst_17 {dimension_numbers = #tpu.dot_dimension_numbers<[1], [0], [0], [1], [0, 0, 1, 1], [], []>} : vector<256x64xf32>, vector<64x1xf32>, vector<256x1xf32> -> vector<256x1xf32>
    %c0_18 = arith.constant 0 : index
    %c0_19 = arith.constant 0 : index
    %21 = vector.load %arg9[%c0_18, %c0_19] : memref<1x1xf32, #tpu.memory_space<vmem>>, vector<1x1xf32>
    %22 = vector.broadcast %21 : vector<1x1xf32> to vector<256x1xf32>
    %23 = arith.addf %20, %22 : vector<256x1xf32>
    %c0_20 = arith.constant 0 : index
    %c0_21 = arith.constant 0 : index
    %24 = vector.load %arg10[%c0_20, %c0_21] : memref<256x1xf32, #tpu.memory_space<vmem>>, vector<256x1xf32>
    tpu.vector_store %arg10[%c0_20, %c0_21], %23 {strides = array<i32>} : memref<256x1xf32, #tpu.memory_space<vmem>>, vector<256x1xf32>,
    return
  }
  func.func @transform_0(%arg0: i32) -> (i32, i32) {
    %c0_i32 = arith.constant 0 : i32
    %c0_i32_0 = arith.constant 0 : i32
    return %arg0, %c0_i32 : i32, i32
  }
  func.func @transform_1(%arg0: i32) -> (i32, i32) {
    %c0_i32 = arith.constant 0 : i32
    %c0_i32_0 = arith.constant 0 : i32
    %c0_i32_1 = arith.constant 0 : i32
    return %c0_i32, %c0_i32_0 : i32, i32
  }
  func.func @transform_2(%arg0: i32) -> (i32, i32) {
    %c0_i32 = arith.constant 0 : i32
    %c0_i32_0 = arith.constant 0 : i32
    %c0_i32_1 = arith.constant 0 : i32
    return %c0_i32, %c0_i32_0 : i32, i32
  }
  func.func @transform_3(%arg0: i32) -> (i32, i32) {
    %c0_i32 = arith.constant 0 : i32
    %c0_i32_0 = arith.constant 0 : i32
    %c0_i32_1 = arith.constant 0 : i32
    return %c0_i32, %c0_i32_0 : i32, i32
  }
  func.func @transform_4(%arg0: i32) -> (i32, i32) {
    %c0_i32 = arith.constant 0 : i32
    %c0_i32_0 = arith.constant 0 : i32
    %c0_i32_1 = arith.constant 0 : i32
    return %c0_i32, %c0_i32_0 : i32, i32
  }
  func.func @transform_5(%arg0: i32) -> (i32, i32) {
    %c0_i32 = arith.constant 0 : i32
    %c0_i32_0 = arith.constant 0 : i32
    %c0_i32_1 = arith.constant 0 : i32
    return %c0_i32, %c0_i32_0 : i32, i32
  }
  func.func @transform_6(%arg0: i32) -> (i32, i32) {
    %c0_i32 = arith.constant 0 : i32
    %c0_i32_0 = arith.constant 0 : i32
    %c0_i32_1 = arith.constant 0 : i32
    return %c0_i32, %c0_i32_0 : i32, i32
  }
  func.func @transform_7(%arg0: i32) -> (i32, i32) {
    %c0_i32 = arith.constant 0 : i32
    %c0_i32_0 = arith.constant 0 : i32
    %c0_i32_1 = arith.constant 0 : i32
    return %c0_i32, %c0_i32_0 : i32, i32
  }
  func.func @transform_8(%arg0: i32) -> (i32, i32) {
    %c0_i32 = arith.constant 0 : i32
    %c0_i32_0 = arith.constant 0 : i32
    %c0_i32_1 = arith.constant 0 : i32
    return %c0_i32, %c0_i32_0 : i32, i32
  }
  func.func @transform_9(%arg0: i32) -> (i32, i32) {
    %c0_i32 = arith.constant 0 : i32
    %c0_i32_0 = arith.constant 0 : i32
    return %arg0, %c0_i32 : i32, i32
  }
}

</mosaic_0001>

<llo_original>
// kernel: tpu_custom_call.1
$region0: #{tpu_custom_call.1}
  #allocation0 [shape = 'u32[]', space=smem, size = 0x4, offset = 0x4, fixed_abs, tag = 'smem constant byte address 0x4 - core index']
  #allocation1 [shape = 'u32[144,128]{1,0:T(1,128)}', space=vmem, size = 0x12000, scoped, tag = 'internal scratch']
  #allocation2 [shape = 'f32[1,1]{1,0:T(1,128)S(1)}', space=vmem, size = 0x200, scoped, tag = 'scoped memory for tpu_custom_call.1']
  %s0 = inlined_call_operand.vmem [shape: f32[256,16], index: 0, kind: input, shape index: {}]
  %s1 = inlined_call_operand.vmem [shape: f32[16,64], index: 1, kind: input, shape index: {}]
  %s2 = inlined_call_operand.vmem [shape: f32[1,64], index: 2, kind: input, shape index: {}]
  %s3 = inlined_call_operand.vmem [shape: f32[64,64], index: 3, kind: input, shape index: {}]
  %s4 = inlined_call_operand.vmem [shape: f32[1,64], index: 4, kind: input, shape index: {}]
  %s5 = inlined_call_operand.vmem [shape: f32[64,64], index: 5, kind: input, shape index: {}]
  %s6 = inlined_call_operand.vmem [shape: f32[1,64], index: 6, kind: input, shape index: {}]
  %s7 = inlined_call_operand.vmem [shape: f32[64,1], index: 7, kind: input, shape index: {}]
  %s8 = inlined_call_operand.<no memory space> [shape: f32[1,1], index: 8, kind: input, shape index: {}]
  %s9 = inlined_call_operand.vmem [shape: f32[256,1], index: 9, kind: output, shape index: {}]
  %s10 = sld [smem:[#allocation0]]
  $region46: #{tpu_custom_call.1} parent=0
    _
  %s12 = ssub.s32 1, %s10
  %s13 = scalar_select 0, %s12, %s10
  %v14 = vstv %s8
  %15 = vst [vmem:[#allocation2] sm:$0x1] %v14
  // Predicated region
  $region2: #{tpu_custom_call.1} parent=0 // pred_check
    _
  $region3: #{tpu_custom_call.1} parent=0 // pred_check_branch
    %17 = sbr.rel (0) target = $region5
  $region4: #{tpu_custom_call.1} parent=0 // pred_region
    _
  $region5: #{tpu_custom_call.1} parent=0 // pred_fallthru
    _
  // Predicated region
  $region6: #{tpu_custom_call.1} parent=0 // pred_check
    _
  $region7: #{tpu_custom_call.1} parent=0 // pred_check_branch
    %19 = sbr.rel (0) target = $region9
  $region8: #{tpu_custom_call.1} parent=0 // pred_region
    _
  $region9: #{tpu_custom_call.1} parent=0 // pred_fallthru
    _
  // Predicated region
  $region10: #{tpu_custom_call.1} parent=0 // pred_check
    _
  $region11: #{tpu_custom_call.1} parent=0 // pred_check_branch
    %21 = sbr.rel (0) target = $region13
  $region12: #{tpu_custom_call.1} parent=0 // pred_region
    _
  $region13: #{tpu_custom_call.1} parent=0 // pred_fallthru
    _
  // Predicated region
  $region14: #{tpu_custom_call.1} parent=0 // pred_check
    _
  $region15: #{tpu_custom_call.1} parent=0 // pred_check_branch
    %23 = sbr.rel (0) target = $region17
  $region16: #{tpu_custom_call.1} parent=0 // pred_region
    _
  $region17: #{tpu_custom_call.1} parent=0 // pred_fallthru
    _
  // Predicated region
  $region18: #{tpu_custom_call.1} parent=0 // pred_check
    _
  $region19: #{tpu_custom_call.1} parent=0 // pred_check_branch
    %25 = sbr.rel (0) target = $region21
  $region20: #{tpu_custom_call.1} parent=0 // pred_region
    _
  $region21: #{tpu_custom_call.1} parent=0 // pred_fallthru
    _
  // Predicated region
  $region22: #{tpu_custom_call.1} parent=0 // pred_check
    _
  $region23: #{tpu_custom_call.1} parent=0 // pred_check_branch
    %27 = sbr.rel (0) target = $region25
  $region24: #{tpu_custom_call.1} parent=0 // pred_region
    _
  $region25: #{tpu_custom_call.1} parent=0 // pred_fallthru
    _
  // Predicated region
  $region26: #{tpu_custom_call.1} parent=0 // pred_check
    _
  $region27: #{tpu_custom_call.1} parent=0 // pred_check_branch
    %29 = sbr.rel (0) target = $region29
  $region28: #{tpu_custom_call.1} parent=0 // pred_region
    _
  $region29: #{tpu_custom_call.1} parent=0 // pred_fallthru
    _
  // Predicated region
  $region30: #{tpu_custom_call.1} parent=0 // pred_check
    _
  $region31: #{tpu_custom_call.1} parent=0 // pred_check_branch
    %31 = sbr.rel (0) target = $region33
  $region32: #{tpu_custom_call.1} parent=0 // pred_region
    _
  $region33: #{tpu_custom_call.1} parent=0 // pred_fallthru
    _
  // Predicated region
  $region34: #{tpu_custom_call.1} parent=0 // pred_check
    _
  $region35: #{tpu_custom_call.1} parent=0 // pred_check_branch
    %33 = sbr.rel (0) target = $region37
  $region36: #{tpu_custom_call.1} parent=0 // pred_region
    _
  $region37: #{tpu_custom_call.1} parent=0 // pred_fallthru
    _
  %v34 = vld [vmem:[%s0] sm:$0xff]
  %v35 = vld [vmem:[%s0 + $0x8] sm:$0xff]
  %v36 = vld [vmem:[%s0 + $0x10] sm:$0xff]
  %v37 = vld [vmem:[%s0 + $0x18] sm:$0xff]
  %v38 = vld [vmem:[%s0 + $0x20] sm:$0xff]
  %v39 = vld [vmem:[%s0 + $0x28] sm:$0xff]
  %v40 = vld [vmem:[%s0 + $0x30] sm:$0xff]
  %v41 = vld [vmem:[%s0 + $0x38] sm:$0xff]
  %v42 = vld [vmem:[%s0 + $0x40] sm:$0xff]
  %v43 = vld [vmem:[%s0 + $0x48] sm:$0xff]
  %v44 = vld [vmem:[%s0 + $0x50] sm:$0xff]
  %v45 = vld [vmem:[%s0 + $0x58] sm:$0xff]
  %v46 = vld [vmem:[%s0 + $0x60] sm:$0xff]
  %v47 = vld [vmem:[%s0 + $0x68] sm:$0xff]
  %v48 = vld [vmem:[%s0 + $0x70] sm:$0xff]
  %v49 = vld [vmem:[%s0 + $0x78] sm:$0xff]
  %v50 = vld [vmem:[%s0 + $0x80] sm:$0xff]
  %v51 = vld [vmem:[%s0 + $0x88] sm:$0xff]
  %v52 = vld [vmem:[%s0 + $0x90] sm:$0xff]
  %v53 = vld [vmem:[%s0 + $0x98] sm:$0xff]
  %v54 = vld [vmem:[%s0 + $0xa0] sm:$0xff]
  %v55 = vld [vmem:[%s0 + $0xa8] sm:$0xff]
  %v56 = vld [vmem:[%s0 + $0xb0] sm:$0xff]
  %v57 = vld [vmem:[%s0 + $0xb8] sm:$0xff]
  %v58 = vld [vmem:[%s0 + $0xc0] sm:$0xff]
  %v59 = vld [vmem:[%s0 + $0xc8] sm:$0xff]
  %v60 = vld [vmem:[%s0 + $0xd0] sm:$0xff]
  %v61 = vld [vmem:[%s0 + $0xd8] sm:$0xff]
  %v62 = vld [vmem:[%s0 + $0xe0] sm:$0xff]
  %v63 = vld [vmem:[%s0 + $0xe8] sm:$0xff]
  %v64 = vld [vmem:[%s0 + $0xf0] sm:$0xff]
  %v65 = vld [vmem:[%s0 + $0xf8] sm:$0xff]
  %v66 = vld [vmem:[%s1] sm:$0xff]
  %v67 = vld [vmem:[%s1 + $0x8] sm:$0xff]
  %v68 = vld [vmem:[%s2] sm:$0x1]
  %v70 = vlaneseq
  %v71 = vshrl.u32 %v70, 7
  %v72 = vsub.s32 0, %v71
  %v73 = vrot.slane %v68, %v72
  %vm75 = vcmask 130048
  %v77 = vsel %vm75, %v34, 0
  %v80 = vsel %vm75, %v35, 0
  %v83 = vsel %vm75, %v36, 0
  %v86 = vsel %vm75, %v37, 0
  %v89 = vsel %vm75, %v38, 0
  %v92 = vsel %vm75, %v39, 0
  %v95 = vsel %vm75, %v40, 0
  %v98 = vsel %vm75, %v41, 0
  %v101 = vsel %vm75, %v42, 0
  %v104 = vsel %vm75, %v43, 0
  %v107 = vsel %vm75, %v44, 0
  %v110 = vsel %vm75, %v45, 0
  %v113 = vsel %vm75, %v46, 0
  %v116 = vsel %vm75, %v47, 0
  %v119 = vsel %vm75, %v48, 0
  %v122 = vsel %vm75, %v49, 0
  %v125 = vsel %vm75, %v50, 0
  %v128 = vsel %vm75, %v51, 0
  %v131 = vsel %vm75, %v52, 0
  %v134 = vsel %vm75, %v53, 0
  %v137 = vsel %vm75, %v54, 0
  %v140 = vsel %vm75, %v55, 0
  %v143 = vsel %vm75, %v56, 0
  %v146 = vsel %vm75, %v57, 0
  %v149 = vsel %vm75, %v58, 0
  %v152 = vsel %vm75, %v59, 0
  %v155 = vsel %vm75, %v60, 0
  %v158 = vsel %vm75, %v61, 0
  %v161 = vsel %vm75, %v62, 0
  %v164 = vsel %vm75, %v63, 0
  %v167 = vsel %vm75, %v64, 0
  %v170 = vsel %vm75, %v65, 0
  %172 = vmatprep.subr.mxu0 0.0
  %173 = vmatpush1.msra.mxu0 %v66
  %174 = vmatprep.subr.mxu0 0.0
  %175 = vmatpush1.msra.mxu0 %v67
  %176 = vmatprep.subr.mxu0 0.0
  %177 = vmatpush1.msra.mxu0 0.0
  %178 = vmatprep.subr.mxu0 0.0
  %179 = vmatpush1.msra.mxu0 0.0
  %180 = vmatprep.subr.mxu0 0.0
  %181 = vmatpush1.msra.mxu0 0.0
  %182 = vmatprep.subr.mxu0 0.0
  %183 = vmatpush1.msra.mxu0 0.0
  %184 = vmatprep.subr.mxu0 0.0
  %185 = vmatpush1.msra.mxu0 0.0
  %186 = vmatprep.subr.mxu0 0.0
  %187 = vmatpush1.msra.mxu0 0.0
  %188 = vmatprep.subr.mxu0 0.0
  %189 = vmatpush1.msra.mxu0 0.0
  %190 = vmatprep.subr.mxu0 0.0
  %191 = vmatpush1.msra.mxu0 0.0
  %192 = vmatprep.subr.mxu0 0.0
  %193 = vmatpush1.msra.mxu0 0.0
  %194 = vmatprep.subr.mxu0 0.0
  %195 = vmatpush1.msra.mxu0 0.0
  %196 = vmatprep.subr.mxu0 0.0
  %197 = vmatpush1.msra.mxu0 0.0
  %198 = vmatprep.subr.mxu0 0.0
  %199 = vmatpush1.msra.mxu0 0.0
  %200 = vmatprep.subr.mxu0 0.0
  %201 = vmatpush1.msra.mxu0 0.0
  %202 = vmatprep.subr.mxu0 0.0
  %203 = vmatpush1.msra.mxu0 0.0
  %204 = vmatprep.subr.mxu0 0.0
  %205 = vmatpush1.msra.mxu0 0.0
  %206 = vmatprep.subr.mxu0 0.0
  %207 = vmatpush1.msra.mxu0 0.0
  %208 = vmatprep.subr.mxu0 0.0
  %209 = vmatpush1.msra.mxu0 0.0
  %210 = vmatprep.subr.mxu0 0.0
  %211 = vmatpush1.msra.mxu0 0.0
  %212 = vmatprep.subr.mxu0 0.0
  %213 = vmatpush1.msra.mxu0 0.0
  %214 = vmatprep.subr.mxu0 0.0
  %215 = vmatpush1.msra.mxu0 0.0
  %216 = vmatprep.subr.mxu0 0.0
  %217 = vmatpush1.msra.mxu0 0.0
  %218 = vmatprep.subr.mxu0 0.0
  %219 = vmatpush1.msra.mxu0 0.0
  %220 = vmatprep.subr.mxu0 0.0
  %221 = vmatpush1.msra.mxu0 0.0
  %222 = vmatprep.subr.mxu0 0.0
  %223 = vmatpush1.msra.mxu0 0.0
  %224 = vmatprep.subr.mxu0 0.0
  %225 = vmatpush1.msra.mxu0 0.0
  %226 = vmatprep.subr.mxu0 0.0
  %227 = vmatpush1.msra.mxu0 0.0
  %228 = vmatprep.subr.mxu0 0.0
  %229 = vmatpush1.msra.mxu0 0.0
  %230 = vmatprep.subr.mxu0 0.0
  %231 = vmatpush1.msra.mxu0 0.0
  %232 = vmatprep.subr.mxu0 0.0
  %233 = vmatpush1.msra.mxu0 0.0
  %234 = vmatprep.subr.mxu0 0.0
  %235 = vmatpush1.msra.mxu0 0.0
  %236 = vmatprep.mubr.f32.mxu0 0.0
  %237 = vmatmul.mubr.f32.gmra.mrb[0].mxu0 %v77
  %v238 = vpop.f32.mrb[0].mxu0
  %v239 = vadd.f32 %v73, %v238
  %v240 = vpop.f32.mrb[0].mxu0
  %241 = vmatprep.mubr.f32.mxu0 0.0
  %242 = vmatmul.mubr.f32.gmra.mrb[0].mxu0 %v80
  %v243 = vpop.f32.mrb[0].mxu0
  %v244 = vadd.f32 %v73, %v243
  %v245 = vpop.f32.mrb[0].mxu0
  %246 = vmatprep.mubr.f32.mxu0 0.0
  %247 = vmatmul.mubr.f32.gmra.mrb[0].mxu0 %v83
  %v248 = vpop.f32.mrb[0].mxu0
  %v249 = vadd.f32 %v73, %v248
  %v250 = vpop.f32.mrb[0].mxu0
  %251 = vmatprep.mubr.f32.mxu0 0.0
  %252 = vmatmul.mubr.f32.gmra.mrb[0].mxu0 %v86
  %v253 = vpop.f32.mrb[0].mxu0
  %v254 = vadd.f32 %v73, %v253
  %v255 = vpop.f32.mrb[0].mxu0
  %256 = vmatprep.mubr.f32.mxu0 0.0
  %257 = vmatmul.mubr.f32.gmra.mrb[0].mxu0 %v89
  %v258 = vpop.f32.mrb[0].mxu0
  %v259 = vadd.f32 %v73, %v258
  %v260 = vpop.f32.mrb[0].mxu0
  %261 = vmatprep.mubr.f32.mxu0 0.0
  %262 = vmatmul.mubr.f32.gmra.mrb[0].mxu0 %v92
  %v263 = vpop.f32.mrb[0].mxu0
  %v264 = vadd.f32 %v73, %v263
  %v265 = vpop.f32.mrb[0].mxu0
  %266 = vmatprep.mubr.f32.mxu0 0.0
  %267 = vmatmul.mubr.f32.gmra.mrb[0].mxu0 %v95
  %v268 = vpop.f32.mrb[0].mxu0
  %v269 = vadd.f32 %v73, %v268
  %v270 = vpop.f32.mrb[0].mxu0
  %271 = vmatprep.mubr.f32.mxu0 0.0
  %272 = vmatmul.mubr.f32.gmra.mrb[0].mxu0 %v98
  %v273 = vpop.f32.mrb[0].mxu0
  %v274 = vadd.f32 %v73, %v273
  %v275 = vpop.f32.mrb[0].mxu0
  %276 = vmatprep.mubr.f32.mxu0 0.0
  %277 = vmatmul.mubr.f32.gmra.mrb[0].mxu0 %v101
  %v278 = vpop.f32.mrb[0].mxu0
  %v279 = vadd.f32 %v73, %v278
  %v280 = vpop.f32.mrb[0].mxu0
  %281 = vmatprep.mubr.f32.mxu0 0.0
  %282 = vmatmul.mubr.f32.gmra.mrb[0].mxu0 %v104
  %v283 = vpop.f32.mrb[0].mxu0
  %v284 = vadd.f32 %v73, %v283
  %v285 = vpop.f32.mrb[0].mxu0
  %286 = vmatprep.mubr.f32.mxu0 0.0
  %287 = vmatmul.mubr.f32.gmra.mrb[0].mxu0 %v107
  %v288 = vpop.f32.mrb[0].mxu0
  %v289 = vadd.f32 %v73, %v288
  %v290 = vpop.f32.mrb[0].mxu0
  %291 = vmatprep.mubr.f32.mxu0 0.0
  %292 = vmatmul.mubr.f32.gmra.mrb[0].mxu0 %v110
  %v293 = vpop.f32.mrb[0].mxu0
  %v294 = vadd.f32 %v73, %v293
  %v295 = vpop.f32.mrb[0].mxu0
  %296 = vmatprep.mubr.f32.mxu0 0.0
  %297 = vmatmul.mubr.f32.gmra.mrb[0].mxu0 %v113
  %v298 = vpop.f32.mrb[0].mxu0
  %v299 = vadd.f32 %v73, %v298
  %v300 = vpop.f32.mrb[0].mxu0
  %301 = vmatprep.mubr.f32.mxu0 0.0
  %302 = vmatmul.mubr.f32.gmra.mrb[0].mxu0 %v116
  %v303 = vpop.f32.mrb[0].mxu0
  %v304 = vadd.f32 %v73, %v303
  %v305 = vpop.f32.mrb[0].mxu0
  %306 = vmatprep.mubr.f32.mxu0 0.0
  %307 = vmatmul.mubr.f32.gmra.mrb[0].mxu0 %v119
  %v308 = vpop.f32.mrb[0].mxu0
  %v309 = vadd.f32 %v73, %v308
  %v310 = vpop.f32.mrb[0].mxu0
  %311 = vmatprep.mubr.f32.mxu0 0.0
  %312 = vmatmul.mubr.f32.gmra.mrb[0].mxu0 %v122
  %v313 = vpop.f32.mrb[0].mxu0
  %v314 = vadd.f32 %v73, %v313
  %v315 = vpop.f32.mrb[0].mxu0
  %316 = vmatprep.mubr.f32.mxu0 0.0
  %317 = vmatmul.mubr.f32.gmra.mrb[0].mxu0 %v125
  %v318 = vpop.f32.mrb[0].mxu0
  %v319 = vadd.f32 %v73, %v318
  %v320 = vpop.f32.mrb[0].mxu0
  %321 = vmatprep.mubr.f32.mxu0 0.0
  %322 = vmatmul.mubr.f32.gmra.mrb[0].mxu0 %v128
  %v323 = vpop.f32.mrb[0].mxu0
  %v324 = vadd.f32 %v73, %v323
  %v325 = vpop.f32.mrb[0].mxu0
  %326 = vmatprep.mubr.f32.mxu0 0.0
  %327 = vmatmul.mubr.f32.gmra.mrb[0].mxu0 %v131
  %v328 = vpop.f32.mrb[0].mxu0
  %v329 = vadd.f32 %v73, %v328
  %v330 = vpop.f32.mrb[0].mxu0
  %331 = vmatprep.mubr.f32.mxu0 0.0
  %332 = vmatmul.mubr.f32.gmra.mrb[0].mxu0 %v134
  %v333 = vpop.f32.mrb[0].mxu0
  %v334 = vadd.f32 %v73, %v333
  %v335 = vpop.f32.mrb[0].mxu0
  %336 = vmatprep.mubr.f32.mxu0 0.0
  %337 = vmatmul.mubr.f32.gmra.mrb[0].mxu0 %v137
  %v338 = vpop.f32.mrb[0].mxu0
  %v339 = vadd.f32 %v73, %v338
  %v340 = vpop.f32.mrb[0].mxu0
  %341 = vmatprep.mubr.f32.mxu0 0.0
  %342 = vmatmul.mubr.f32.gmra.mrb[0].mxu0 %v140
  %v343 = vpop.f32.mrb[0].mxu0
  %v344 = vadd.f32 %v73, %v343
  %v345 = vpop.f32.mrb[0].mxu0
  %346 = vmatprep.mubr.f32.mxu0 0.0
  %347 = vmatmul.mubr.f32.gmra.mrb[0].mxu0 %v143
  %v348 = vpop.f32.mrb[0].mxu0
  %v349 = vadd.f32 %v73, %v348
  %v350 = vpop.f32.mrb[0].mxu0
  %351 = vmatprep.mubr.f32.mxu0 0.0
  %352 = vmatmul.mubr.f32.gmra.mrb[0].mxu0 %v146
  %v353 = vpop.f32.mrb[0].mxu0
  %v354 = vadd.f32 %v73, %v353
  %v355 = vpop.f32.mrb[0].mxu0
  %356 = vmatprep.mubr.f32.mxu0 0.0
  %357 = vmatmul.mubr.f32.gmra.mrb[0].mxu0 %v149
  %v358 = vpop.f32.mrb[0].mxu0
  %v359 = vadd.f32 %v73, %v358
  %v360 = vpop.f32.mrb[0].mxu0
  %361 = vmatprep.mubr.f32.mxu0 0.0
  %362 = vmatmul.mubr.f32.gmra.mrb[0].mxu0 %v152
  %v363 = vpop.f32.mrb[0].mxu0
  %v364 = vadd.f32 %v73, %v363
  %v365 = vpop.f32.mrb[0].mxu0
  %366 = vmatprep.mubr.f32.mxu0 0.0
  %367 = vmatmul.mubr.f32.gmra.mrb[0].mxu0 %v155
  %v368 = vpop.f32.mrb[0].mxu0
  %v369 = vadd.f32 %v73, %v368
  %v370 = vpop.f32.mrb[0].mxu0
  %371 = vmatprep.mubr.f32.mxu0 0.0
  %372 = vmatmul.mubr.f32.gmra.mrb[0].mxu0 %v158
  %v373 = vpop.f32.mrb[0].mxu0
  %v374 = vadd.f32 %v73, %v373
  %v375 = vpop.f32.mrb[0].mxu0
  %376 = vmatprep.mubr.f32.mxu0 0.0
  %377 = vmatmul.mubr.f32.gmra.mrb[0].mxu0 %v161
  %v378 = vpop.f32.mrb[0].mxu0
  %v379 = vadd.f32 %v73, %v378
  %v380 = vpop.f32.mrb[0].mxu0
  %381 = vmatprep.mubr.f32.mxu0 0.0
  %382 = vmatmul.mubr.f32.gmra.mrb[0].mxu0 %v164
  %v383 = vpop.f32.mrb[0].mxu0
  %v384 = vadd.f32 %v73, %v383
  %v385 = vpop.f32.mrb[0].mxu0
  %386 = vmatprep.mubr.f32.mxu0 0.0
  %387 = vmatmul.mubr.f32.gmra.mrb[0].mxu0 %v167
  %v388 = vpop.f32.mrb[0].mxu0
  %v389 = vadd.f32 %v73, %v388
  %v390 = vpop.f32.mrb[0].mxu0
  %391 = vmatprep.mubr.f32.mxu0 0.0
  %392 = vmatmul.mubr.f32.gmra.mrb[0].mxu0 %v170
  %v393 = vpop.f32.mrb[0].mxu0
  %v394 = vadd.f32 %v73, %v393
  %v395 = vpop.f32.mrb[0].mxu0
  %396 = vdwg.mxu0
  %v397 = vtanh.pop %v239
  %v398 = vtanh.pop %v244
  %v399 = vtanh.pop %v249
  %v400 = vtanh.pop %v254
  %v401 = vtanh.pop %v259
  %v402 = vtanh.pop %v264
  %v403 = vtanh.pop %v269
  %v404 = vtanh.pop %v274
  %v405 = vtanh.pop %v279
  %v406 = vtanh.pop %v284
  %v407 = vtanh.pop %v289
  %v408 = vtanh.pop %v294
  %v409 = vtanh.pop %v299
  %v410 = vtanh.pop %v304
  %v411 = vtanh.pop %v309
  %v412 = vtanh.pop %v314
  %v413 = vtanh.pop %v319
  %v414 = vtanh.pop %v324
  %v415 = vtanh.pop %v329
  %v416 = vtanh.pop %v334
  %v417 = vtanh.pop %v339
  %v418 = vtanh.pop %v344
  %v419 = vtanh.pop %v349
  %v420 = vtanh.pop %v354
  %v421 = vtanh.pop %v359
  %v422 = vtanh.pop %v364
  %v423 = vtanh.pop %v369
  %v424 = vtanh.pop %v374
  %v425 = vtanh.pop %v379
  %v426 = vtanh.pop %v384
  %v427 = vtanh.pop %v389
  %v428 = vtanh.pop %v394
  %v429 = vld [vmem:[%s3] sm:$0xff]
  %v430 = vld [vmem:[%s3 + $0x8] sm:$0xff]
  %v431 = vld [vmem:[%s3 + $0x10] sm:$0xff]
  %v432 = vld [vmem:[%s3 + $0x18] sm:$0xff]
  %v433 = vld [vmem:[%s3 + $0x20] sm:$0xff]
  %v434 = vld [vmem:[%s3 + $0x28] sm:$0xff]
  %v435 = vld [vmem:[%s3 + $0x30] sm:$0xff]
  %v436 = vld [vmem:[%s3 + $0x38] sm:$0xff]
  %v437 = vld [vmem:[%s4] sm:$0x1]
  %v439 = vlaneseq
  %v440 = vshrl.u32 %v439, 7
  %v441 = vsub.s32 0, %v440
  %v442 = vrot.slane %v437, %v441
  %vm444 = vcmask 523264
  %v446 = vsel %vm444, %v397, 0
  %v449 = vsel %vm444, %v398, 0
  %v452 = vsel %vm444, %v399, 0
  %v455 = vsel %vm444, %v400, 0
  %v458 = vsel %vm444, %v401, 0
  %v461 = vsel %vm444, %v402, 0
  %v464 = vsel %vm444, %v403, 0
  %v467 = vsel %vm444, %v404, 0
  %v470 = vsel %vm444, %v405, 0
  %v473 = vsel %vm444, %v406, 0
  %v476 = vsel %vm444, %v407, 0
  %v479 = vsel %vm444, %v408, 0
  %v482 = vsel %vm444, %v409, 0
  %v485 = vsel %vm444, %v410, 0
  %v488 = vsel %vm444, %v411, 0
  %v491 = vsel %vm444, %v412, 0
  %v494 = vsel %vm444, %v413, 0
  %v497 = vsel %vm444, %v414, 0
  %v500 = vsel %vm444, %v415, 0
  %v503 = vsel %vm444, %v416, 0
  %v506 = vsel %vm444, %v417, 0
  %v509 = vsel %vm444, %v418, 0
  %v512 = vsel %vm444, %v419, 0
  %v515 = vsel %vm444, %v420, 0
  %v518 = vsel %vm444, %v421, 0
  %v521 = vsel %vm444, %v422, 0
  %v524 = vsel %vm444, %v423, 0
  %v527 = vsel %vm444, %v424, 0
  %v530 = vsel %vm444, %v425, 0
  %v533 = vsel %vm444, %v426, 0
  %v536 = vsel %vm444, %v427, 0
  %v539 = vsel %vm444, %v428, 0
  %541 = vmatprep.subr.mxu0 0.0
  %542 = vmatpush1.msra.mxu0 %v429
  %543 = vmatprep.subr.mxu0 0.0
  %544 = vmatpush1.msra.mxu0 %v430
  %545 = vmatprep.subr.mxu0 0.0
  %546 = vmatpush1.msra.mxu0 %v431
  %547 = vmatprep.subr.mxu0 0.0
  %548 = vmatpush1.msra.mxu0 %v432
  %549 = vmatprep.subr.mxu0 0.0
  %550 = vmatpush1.msra.mxu0 %v433
  %551 = vmatprep.subr.mxu0 0.0
  %552 = vmatpush1.msra.mxu0 %v434
  %553 = vmatprep.subr.mxu0 0.0
  %554 = vmatpush1.msra.mxu0 %v435
  %555 = vmatprep.subr.mxu0 0.0
  %556 = vmatpush1.msra.mxu0 %v436
  %557 = vmatprep.subr.mxu0 0.0
  %558 = vmatpush1.msra.mxu0 0.0
  %559 = vmatprep.subr.mxu0 0.0
  %560 = vmatpush1.msra.mxu0 0.0
  %561 = vmatprep.subr.mxu0 0.0
  %562 = vmatpush1.msra.mxu0 0.0
  %563 = vmatprep.subr.mxu0 0.0
  %564 = vmatpush1.msra.mxu0 0.0
  %565 = vmatprep.subr.mxu0 0.0
  %566 = vmatpush1.msra.mxu0 0.0
  %567 = vmatprep.subr.mxu0 0.0
  %568 = vmatpush1.msra.mxu0 0.0
  %569 = vmatprep.subr.mxu0 0.0
  %570 = vmatpush1.msra.mxu0 0.0
  %571 = vmatprep.subr.mxu0 0.0
  %572 = vmatpush1.msra.mxu0 0.0
  %573 = vmatprep.subr.mxu0 0.0
  %574 = vmatpush1.msra.mxu0 0.0
  %575 = vmatprep.subr.mxu0 0.0
  %576 = vmatpush1.msra.mxu0 0.0
  %577 = vmatprep.subr.mxu0 0.0
  %578 = vmatpush1.msra.mxu0 0.0
  %579 = vmatprep.subr.mxu0 0.0
  %580 = vmatpush1.msra.mxu0 0.0
  %581 = vmatprep.subr.mxu0 0.0
  %582 = vmatpush1.msra.mxu0 0.0
  %583 = vmatprep.subr.mxu0 0.0
  %584 = vmatpush1.msra.mxu0 0.0
  %585 = vmatprep.subr.mxu0 0.0
  %586 = vmatpush1.msra.mxu0 0.0
  %587 = vmatprep.subr.mxu0 0.0
  %588 = vmatpush1.msra.mxu0 0.0
  %589 = vmatprep.subr.mxu0 0.0
  %590 = vmatpush1.msra.mxu0 0.0
  %591 = vmatprep.subr.mxu0 0.0
  %592 = vmatpush1.msra.mxu0 0.0
  %593 = vmatprep.subr.mxu0 0.0
  %594 = vmatpush1.msra.mxu0 0.0
  %595 = vmatprep.subr.mxu0 0.0
  %596 = vmatpush1.msra.mxu0 0.0
  %597 = vmatprep.subr.mxu0 0.0
  %598 = vmatpush1.msra.mxu0 0.0
  %599 = vmatprep.subr.mxu0 0.0
  %600 = vmatpush1.msra.mxu0 0.0
  %601 = vmatprep.subr.mxu0 0.0
  %602 = vmatpush1.msra.mxu0 0.0
  %603 = vmatprep.subr.mxu0 0.0
  %604 = vmatpush1.msra.mxu0 0.0
  %605 = vmatprep.mubr.f32.mxu0 0.0
  %606 = vmatmul.mubr.f32.gmra.mrb[0].mxu0 %v446
  %v607 = vpop.f32.mrb[0].mxu0
  %v608 = vadd.f32 %v442, %v607
  %v609 = vpop.f32.mrb[0].mxu0
  %610 = vmatprep.mubr.f32.mxu0 0.0
  %611 = vmatmul.mubr.f32.gmra.mrb[0].mxu0 %v449
  %v612 = vpop.f32.mrb[0].mxu0
  %v613 = vadd.f32 %v442, %v612
  %v614 = vpop.f32.mrb[0].mxu0
  %615 = vmatprep.mubr.f32.mxu0 0.0
  %616 = vmatmul.mubr.f32.gmra.mrb[0].mxu0 %v452
  %v617 = vpop.f32.mrb[0].mxu0
  %v618 = vadd.f32 %v442, %v617
  %v619 = vpop.f32.mrb[0].mxu0
  %620 = vmatprep.mubr.f32.mxu0 0.0
  %621 = vmatmul.mubr.f32.gmra.mrb[0].mxu0 %v455
  %v622 = vpop.f32.mrb[0].mxu0
  %v623 = vadd.f32 %v442, %v622
  %v624 = vpop.f32.mrb[0].mxu0
  %625 = vmatprep.mubr.f32.mxu0 0.0
  %626 = vmatmul.mubr.f32.gmra.mrb[0].mxu0 %v458
  %v627 = vpop.f32.mrb[0].mxu0
  %v628 = vadd.f32 %v442, %v627
  %v629 = vpop.f32.mrb[0].mxu0
  %630 = vmatprep.mubr.f32.mxu0 0.0
  %631 = vmatmul.mubr.f32.gmra.mrb[0].mxu0 %v461
  %v632 = vpop.f32.mrb[0].mxu0
  %v633 = vadd.f32 %v442, %v632
  %v634 = vpop.f32.mrb[0].mxu0
  %635 = vmatprep.mubr.f32.mxu0 0.0
  %636 = vmatmul.mubr.f32.gmra.mrb[0].mxu0 %v464
  %v637 = vpop.f32.mrb[0].mxu0
  %v638 = vadd.f32 %v442, %v637
  %v639 = vpop.f32.mrb[0].mxu0
  %640 = vmatprep.mubr.f32.mxu0 0.0
  %641 = vmatmul.mubr.f32.gmra.mrb[0].mxu0 %v467
  %v642 = vpop.f32.mrb[0].mxu0
  %v643 = vadd.f32 %v442, %v642
  %v644 = vpop.f32.mrb[0].mxu0
  %645 = vmatprep.mubr.f32.mxu0 0.0
  %646 = vmatmul.mubr.f32.gmra.mrb[0].mxu0 %v470
  %v647 = vpop.f32.mrb[0].mxu0
  %v648 = vadd.f32 %v442, %v647
  %v649 = vpop.f32.mrb[0].mxu0
  %650 = vmatprep.mubr.f32.mxu0 0.0
  %651 = vmatmul.mubr.f32.gmra.mrb[0].mxu0 %v473
  %v652 = vpop.f32.mrb[0].mxu0
  %v653 = vadd.f32 %v442, %v652
  %v654 = vpop.f32.mrb[0].mxu0
  %655 = vmatprep.mubr.f32.mxu0 0.0
  %656 = vmatmul.mubr.f32.gmra.mrb[0].mxu0 %v476
  %v657 = vpop.f32.mrb[0].mxu0
  %v658 = vadd.f32 %v442, %v657
  %v659 = vpop.f32.mrb[0].mxu0
  %660 = vmatprep.mubr.f32.mxu0 0.0
  %661 = vmatmul.mubr.f32.gmra.mrb[0].mxu0 %v479
  %v662 = vpop.f32.mrb[0].mxu0
  %v663 = vadd.f32 %v442, %v662
  %v664 = vpop.f32.mrb[0].mxu0
  %665 = vmatprep.mubr.f32.mxu0 0.0
  %666 = vmatmul.mubr.f32.gmra.mrb[0].mxu0 %v482
  %v667 = vpop.f32.mrb[0].mxu0
  %v668 = vadd.f32 %v442, %v667
  %v669 = vpop.f32.mrb[0].mxu0
  %670 = vmatprep.mubr.f32.mxu0 0.0
  %671 = vmatmul.mubr.f32.gmra.mrb[0].mxu0 %v485
  %v672 = vpop.f32.mrb[0].mxu0
  %v673 = vadd.f32 %v442, %v672
  %v674 = vpop.f32.mrb[0].mxu0
  %675 = vmatprep.mubr.f32.mxu0 0.0
  %676 = vmatmul.mubr.f32.gmra.mrb[0].mxu0 %v488
  %v677 = vpop.f32.mrb[0].mxu0
  %v678 = vadd.f32 %v442, %v677
  %v679 = vpop.f32.mrb[0].mxu0
  %680 = vmatprep.mubr.f32.mxu0 0.0
  %681 = vmatmul.mubr.f32.gmra.mrb[0].mxu0 %v491
  %v682 = vpop.f32.mrb[0].mxu0
  %v683 = vadd.f32 %v442, %v682
  %v684 = vpop.f32.mrb[0].mxu0
  %685 = vmatprep.mubr.f32.mxu0 0.0
  %686 = vmatmul.mubr.f32.gmra.mrb[0].mxu0 %v494
  %v687 = vpop.f32.mrb[0].mxu0
  %v688 = vadd.f32 %v442, %v687
  %v689 = vpop.f32.mrb[0].mxu0
  %690 = vmatprep.mubr.f32.mxu0 0.0
  %691 = vmatmul.mubr.f32.gmra.mrb[0].mxu0 %v497
  %v692 = vpop.f32.mrb[0].mxu0
  %v693 = vadd.f32 %v442, %v692
  %v694 = vpop.f32.mrb[0].mxu0
  %695 = vmatprep.mubr.f32.mxu0 0.0
  %696 = vmatmul.mubr.f32.gmra.mrb[0].mxu0 %v500
  %v697 = vpop.f32.mrb[0].mxu0
  %v698 = vadd.f32 %v442, %v697
  %v699 = vpop.f32.mrb[0].mxu0
  %700 = vmatprep.mubr.f32.mxu0 0.0
  %701 = vmatmul.mubr.f32.gmra.mrb[0].mxu0 %v503
  %v702 = vpop.f32.mrb[0].mxu0
  %v703 = vadd.f32 %v442, %v702
  %v704 = vpop.f32.mrb[0].mxu0
  %705 = vmatprep.mubr.f32.mxu0 0.0
  %706 = vmatmul.mubr.f32.gmra.mrb[0].mxu0 %v506
  %v707 = vpop.f32.mrb[0].mxu0
  %v708 = vadd.f32 %v442, %v707
  %v709 = vpop.f32.mrb[0].mxu0
  %710 = vmatprep.mubr.f32.mxu0 0.0
  %711 = vmatmul.mubr.f32.gmra.mrb[0].mxu0 %v509
  %v712 = vpop.f32.mrb[0].mxu0
  %v713 = vadd.f32 %v442, %v712
  %v714 = vpop.f32.mrb[0].mxu0
  %715 = vmatprep.mubr.f32.mxu0 0.0
  %716 = vmatmul.mubr.f32.gmra.mrb[0].mxu0 %v512
  %v717 = vpop.f32.mrb[0].mxu0
  %v718 = vadd.f32 %v442, %v717
  %v719 = vpop.f32.mrb[0].mxu0
  %720 = vmatprep.mubr.f32.mxu0 0.0
  %721 = vmatmul.mubr.f32.gmra.mrb[0].mxu0 %v515
  %v722 = vpop.f32.mrb[0].mxu0
  %v723 = vadd.f32 %v442, %v722
  %v724 = vpop.f32.mrb[0].mxu0
  %725 = vmatprep.mubr.f32.mxu0 0.0
  %726 = vmatmul.mubr.f32.gmra.mrb[0].mxu0 %v518
  %v727 = vpop.f32.mrb[0].mxu0
  %v728 = vadd.f32 %v442, %v727
  %v729 = vpop.f32.mrb[0].mxu0
  %730 = vmatprep.mubr.f32.mxu0 0.0
  %731 = vmatmul.mubr.f32.gmra.mrb[0].mxu0 %v521
  %v732 = vpop.f32.mrb[0].mxu0
  %v733 = vadd.f32 %v442, %v732
  %v734 = vpop.f32.mrb[0].mxu0
  %735 = vmatprep.mubr.f32.mxu0 0.0
  %736 = vmatmul.mubr.f32.gmra.mrb[0].mxu0 %v524
  %v737 = vpop.f32.mrb[0].mxu0
  %v738 = vadd.f32 %v442, %v737
  %v739 = vpop.f32.mrb[0].mxu0
  %740 = vmatprep.mubr.f32.mxu0 0.0
  %741 = vmatmul.mubr.f32.gmra.mrb[0].mxu0 %v527
  %v742 = vpop.f32.mrb[0].mxu0
  %v743 = vadd.f32 %v442, %v742
  %v744 = vpop.f32.mrb[0].mxu0
  %745 = vmatprep.mubr.f32.mxu0 0.0
  %746 = vmatmul.mubr.f32.gmra.mrb[0].mxu0 %v530
  %v747 = vpop.f32.mrb[0].mxu0
  %v748 = vadd.f32 %v442, %v747
  %v749 = vpop.f32.mrb[0].mxu0
  %750 = vmatprep.mubr.f32.mxu0 0.0
  %751 = vmatmul.mubr.f32.gmra.mrb[0].mxu0 %v533
  %v752 = vpop.f32.mrb[0].mxu0
  %v753 = vadd.f32 %v442, %v752
  %v754 = vpop.f32.mrb[0].mxu0
  %755 = vmatprep.mubr.f32.mxu0 0.0
  %756 = vmatmul.mubr.f32.gmra.mrb[0].mxu0 %v536
  %v757 = vpop.f32.mrb[0].mxu0
  %v758 = vadd.f32 %v442, %v757
  %v759 = vpop.f32.mrb[0].mxu0
  %760 = vmatprep.mubr.f32.mxu0 0.0
  %761 = vmatmul.mubr.f32.gmra.mrb[0].mxu0 %v539
  %v762 = vpop.f32.mrb[0].mxu0
  %v763 = vadd.f32 %v442, %v762
  %v764 = vpop.f32.mrb[0].mxu0
  %765 = vdwg.mxu0
  %v766 = vtanh.pop %v608
  %v767 = vtanh.pop %v613
  %v768 = vtanh.pop %v618
  %v769 = vtanh.pop %v623
  %v770 = vtanh.pop %v628
  %v771 = vtanh.pop %v633
  %v772 = vtanh.pop %v638
  %v773 = vtanh.pop %v643
  %v774 = vtanh.pop %v648
  %v775 = vtanh.pop %v653
  %v776 = vtanh.pop %v658
  %v777 = vtanh.pop %v663
  %v778 = vtanh.pop %v668
  %v779 = vtanh.pop %v673
  %v780 = vtanh.pop %v678
  %v781 = vtanh.pop %v683
  %v782 = vtanh.pop %v688
  %v783 = vtanh.pop %v693
  %v784 = vtanh.pop %v698
  %v785 = vtanh.pop %v703
  %v786 = vtanh.pop %v708
  %v787 = vtanh.pop %v713
  %v788 = vtanh.pop %v718
  %v789 = vtanh.pop %v723
  %v790 = vtanh.pop %v728
  %v791 = vtanh.pop %v733
  %v792 = vtanh.pop %v738
  %v793 = vtanh.pop %v743
  %v794 = vtanh.pop %v748
  %v795 = vtanh.pop %v753
  %v796 = vtanh.pop %v758
  %v797 = vtanh.pop %v763
  %v798 = vld [vmem:[%s5] sm:$0xff]
  %v799 = vld [vmem:[%s5 + $0x8] sm:$0xff]
  %v800 = vld [vmem:[%s5 + $0x10] sm:$0xff]
  %v801 = vld [vmem:[%s5 + $0x18] sm:$0xff]
  %v802 = vld [vmem:[%s5 + $0x20] sm:$0xff]
  %v803 = vld [vmem:[%s5 + $0x28] sm:$0xff]
  %v804 = vld [vmem:[%s5 + $0x30] sm:$0xff]
  %v805 = vld [vmem:[%s5 + $0x38] sm:$0xff]
  %v806 = vld [vmem:[%s6] sm:$0x1]
  %v808 = vlaneseq
  %v809 = vshrl.u32 %v808, 7
  %v810 = vsub.s32 0, %v809
  %v811 = vrot.slane %v806, %v810
  %v814 = vsel %vm444, %v766, 0
  %v817 = vsel %vm444, %v767, 0
  %v820 = vsel %vm444, %v768, 0
  %v823 = vsel %vm444, %v769, 0
  %v826 = vsel %vm444, %v770, 0
  %v829 = vsel %vm444, %v771, 0
  %v832 = vsel %vm444, %v772, 0
  %v835 = vsel %vm444, %v773, 0
  %v838 = vsel %vm444, %v774, 0
  %v841 = vsel %vm444, %v775, 0
  %v844 = vsel %vm444, %v776, 0
  %v847 = vsel %vm444, %v777, 0
  %v850 = vsel %vm444, %v778, 0
  %v853 = vsel %vm444, %v779, 0
  %v856 = vsel %vm444, %v780, 0
  %v859 = vsel %vm444, %v781, 0
  %v862 = vsel %vm444, %v782, 0
  %v865 = vsel %vm444, %v783, 0
  %v868 = vsel %vm444, %v784, 0
  %v871 = vsel %vm444, %v785, 0
  %v874 = vsel %vm444, %v786, 0
  %v877 = vsel %vm444, %v787, 0
  %v880 = vsel %vm444, %v788, 0
  %v883 = vsel %vm444, %v789, 0
  %v886 = vsel %vm444, %v790, 0
  %v889 = vsel %vm444, %v791, 0
  %v892 = vsel %vm444, %v792, 0
  %v895 = vsel %vm444, %v793, 0
  %v898 = vsel %vm444, %v794, 0
  %v901 = vsel %vm444, %v795, 0
  %v904 = vsel %vm444, %v796, 0
  %v907 = vsel %vm444, %v797, 0
  %909 = vmatprep.subr.mxu0 0.0
  %910 = vmatpush1.msra.mxu0 %v798
  %911 = vmatprep.subr.mxu0 0.0
  %912 = vmatpush1.msra.mxu0 %v799
  %913 = vmatprep.subr.mxu0 0.0
  %914 = vmatpush1.msra.mxu0 %v800
  %915 = vmatprep.subr.mxu0 0.0
  %916 = vmatpush1.msra.mxu0 %v801
  %917 = vmatprep.subr.mxu0 0.0
  %918 = vmatpush1.msra.mxu0 %v802
  %919 = vmatprep.subr.mxu0 0.0
  %920 = vmatpush1.msra.mxu0 %v803
  %921 = vmatprep.subr.mxu0 0.0
  %922 = vmatpush1.msra.mxu0 %v804
  %923 = vmatprep.subr.mxu0 0.0
  %924 = vmatpush1.msra.mxu0 %v805
  %925 = vmatprep.subr.mxu0 0.0
  %926 = vmatpush1.msra.mxu0 0.0
  %927 = vmatprep.subr.mxu0 0.0
  %928 = vmatpush1.msra.mxu0 0.0
  %929 = vmatprep.subr.mxu0 0.0
  %930 = vmatpush1.msra.mxu0 0.0
  %931 = vmatprep.subr.mxu0 0.0
  %932 = vmatpush1.msra.mxu0 0.0
  %933 = vmatprep.subr.mxu0 0.0
  %934 = vmatpush1.msra.mxu0 0.0
  %935 = vmatprep.subr.mxu0 0.0
  %936 = vmatpush1.msra.mxu0 0.0
  %937 = vmatprep.subr.mxu0 0.0
  %938 = vmatpush1.msra.mxu0 0.0
  %939 = vmatprep.subr.mxu0 0.0
  %940 = vmatpush1.msra.mxu0 0.0
  %941 = vmatprep.subr.mxu0 0.0
  %942 = vmatpush1.msra.mxu0 0.0
  %943 = vmatprep.subr.mxu0 0.0
  %944 = vmatpush1.msra.mxu0 0.0
  %945 = vmatprep.subr.mxu0 0.0
  %946 = vmatpush1.msra.mxu0 0.0
  %947 = vmatprep.subr.mxu0 0.0
  %948 = vmatpush1.msra.mxu0 0.0
  %949 = vmatprep.subr.mxu0 0.0
  %950 = vmatpush1.msra.mxu0 0.0
  %951 = vmatprep.subr.mxu0 0.0
  %952 = vmatpush1.msra.mxu0 0.0
  %953 = vmatprep.subr.mxu0 0.0
  %954 = vmatpush1.msra.mxu0 0.0
  %955 = vmatprep.subr.mxu0 0.0
  %956 = vmatpush1.msra.mxu0 0.0
  %957 = vmatprep.subr.mxu0 0.0
  %958 = vmatpush1.msra.mxu0 0.0
  %959 = vmatprep.subr.mxu0 0.0
  %960 = vmatpush1.msra.mxu0 0.0
  %961 = vmatprep.subr.mxu0 0.0
  %962 = vmatpush1.msra.mxu0 0.0
  %963 = vmatprep.subr.mxu0 0.0
  %964 = vmatpush1.msra.mxu0 0.0
  %965 = vmatprep.subr.mxu0 0.0
  %966 = vmatpush1.msra.mxu0 0.0
  %967 = vmatprep.subr.mxu0 0.0
  %968 = vmatpush1.msra.mxu0 0.0
  %969 = vmatprep.subr.mxu0 0.0
  %970 = vmatpush1.msra.mxu0 0.0
  %971 = vmatprep.subr.mxu0 0.0
  %972 = vmatpush1.msra.mxu0 0.0
  %973 = vmatprep.mubr.f32.mxu0 0.0
  %974 = vmatmul.mubr.f32.gmra.mrb[0].mxu0 %v814
  %v975 = vpop.f32.mrb[0].mxu0
  %v976 = vadd.f32 %v811, %v975
  %v977 = vpop.f32.mrb[0].mxu0
  %978 = vmatprep.mubr.f32.mxu0 0.0
  %979 = vmatmul.mubr.f32.gmra.mrb[0].mxu0 %v817
  %v980 = vpop.f32.mrb[0].mxu0
  %v981 = vadd.f32 %v811, %v980
  %v982 = vpop.f32.mrb[0].mxu0
  %983 = vmatprep.mubr.f32.mxu0 0.0
  %984 = vmatmul.mubr.f32.gmra.mrb[0].mxu0 %v820
  %v985 = vpop.f32.mrb[0].mxu0
  %v986 = vadd.f32 %v811, %v985
  %v987 = vpop.f32.mrb[0].mxu0
  %988 = vmatprep.mubr.f32.mxu0 0.0
  %989 = vmatmul.mubr.f32.gmra.mrb[0].mxu0 %v823
  %v990 = vpop.f32.mrb[0].mxu0
  %v991 = vadd.f32 %v811, %v990
  %v992 = vpop.f32.mrb[0].mxu0
  %993 = vmatprep.mubr.f32.mxu0 0.0
  %994 = vmatmul.mubr.f32.gmra.mrb[0].mxu0 %v826
  %v995 = vpop.f32.mrb[0].mxu0
  %v996 = vadd.f32 %v811, %v995
  %v997 = vpop.f32.mrb[0].mxu0
  %998 = vmatprep.mubr.f32.mxu0 0.0
  %999 = vmatmul.mubr.f32.gmra.mrb[0].mxu0 %v829
  %v1000 = vpop.f32.mrb[0].mxu0
  %v1001 = vadd.f32 %v811, %v1000
  %v1002 = vpop.f32.mrb[0].mxu0
  %1003 = vmatprep.mubr.f32.mxu0 0.0
  %1004 = vmatmul.mubr.f32.gmra.mrb[0].mxu0 %v832
  %v1005 = vpop.f32.mrb[0].mxu0
  %v1006 = vadd.f32 %v811, %v1005
  %v1007 = vpop.f32.mrb[0].mxu0
  %1008 = vmatprep.mubr.f32.mxu0 0.0
  %1009 = vmatmul.mubr.f32.gmra.mrb[0].mxu0 %v835
  %v1010 = vpop.f32.mrb[0].mxu0
  %v1011 = vadd.f32 %v811, %v1010
  %v1012 = vpop.f32.mrb[0].mxu0
  %1013 = vmatprep.mubr.f32.mxu0 0.0
  %1014 = vmatmul.mubr.f32.gmra.mrb[0].mxu0 %v838
  %v1015 = vpop.f32.mrb[0].mxu0
  %v1016 = vadd.f32 %v811, %v1015
  %v1017 = vpop.f32.mrb[0].mxu0
  %1018 = vmatprep.mubr.f32.mxu0 0.0
  %1019 = vmatmul.mubr.f32.gmra.mrb[0].mxu0 %v841
  %v1020 = vpop.f32.mrb[0].mxu0
  %v1021 = vadd.f32 %v811, %v1020
  %v1022 = vpop.f32.mrb[0].mxu0
  %1023 = vmatprep.mubr.f32.mxu0 0.0
  %1024 = vmatmul.mubr.f32.gmra.mrb[0].mxu0 %v844
  %v1025 = vpop.f32.mrb[0].mxu0
  %v1026 = vadd.f32 %v811, %v1025
  %v1027 = vpop.f32.mrb[0].mxu0
  %1028 = vmatprep.mubr.f32.mxu0 0.0
  %1029 = vmatmul.mubr.f32.gmra.mrb[0].mxu0 %v847
  %v1030 = vpop.f32.mrb[0].mxu0
  %v1031 = vadd.f32 %v811, %v1030
  %v1032 = vpop.f32.mrb[0].mxu0
  %1033 = vmatprep.mubr.f32.mxu0 0.0
  %1034 = vmatmul.mubr.f32.gmra.mrb[0].mxu0 %v850
  %v1035 = vpop.f32.mrb[0].mxu0
  %v1036 = vadd.f32 %v811, %v1035
  %v1037 = vpop.f32.mrb[0].mxu0
  %1038 = vmatprep.mubr.f32.mxu0 0.0
  %1039 = vmatmul.mubr.f32.gmra.mrb[0].mxu0 %v853
  %v1040 = vpop.f32.mrb[0].mxu0
  %v1041 = vadd.f32 %v811, %v1040
  %v1042 = vpop.f32.mrb[0].mxu0
  %1043 = vmatprep.mubr.f32.mxu0 0.0
  %1044 = vmatmul.mubr.f32.gmra.mrb[0].mxu0 %v856
  %v1045 = vpop.f32.mrb[0].mxu0
  %v1046 = vadd.f32 %v811, %v1045
  %v1047 = vpop.f32.mrb[0].mxu0
  %1048 = vmatprep.mubr.f32.mxu0 0.0
  %1049 = vmatmul.mubr.f32.gmra.mrb[0].mxu0 %v859
  %v1050 = vpop.f32.mrb[0].mxu0
  %v1051 = vadd.f32 %v811, %v1050
  %v1052 = vpop.f32.mrb[0].mxu0
  %1053 = vmatprep.mubr.f32.mxu0 0.0
  %1054 = vmatmul.mubr.f32.gmra.mrb[0].mxu0 %v862
  %v1055 = vpop.f32.mrb[0].mxu0
  %v1056 = vadd.f32 %v811, %v1055
  %v1057 = vpop.f32.mrb[0].mxu0
  %1058 = vmatprep.mubr.f32.mxu0 0.0
  %1059 = vmatmul.mubr.f32.gmra.mrb[0].mxu0 %v865
  %v1060 = vpop.f32.mrb[0].mxu0
  %v1061 = vadd.f32 %v811, %v1060
  %v1062 = vpop.f32.mrb[0].mxu0
  %1063 = vmatprep.mubr.f32.mxu0 0.0
  %1064 = vmatmul.mubr.f32.gmra.mrb[0].mxu0 %v868
  %v1065 = vpop.f32.mrb[0].mxu0
  %v1066 = vadd.f32 %v811, %v1065
  %v1067 = vpop.f32.mrb[0].mxu0
  %1068 = vmatprep.mubr.f32.mxu0 0.0
  %1069 = vmatmul.mubr.f32.gmra.mrb[0].mxu0 %v871
  %v1070 = vpop.f32.mrb[0].mxu0
  %v1071 = vadd.f32 %v811, %v1070
  %v1072 = vpop.f32.mrb[0].mxu0
  %1073 = vmatprep.mubr.f32.mxu0 0.0
  %1074 = vmatmul.mubr.f32.gmra.mrb[0].mxu0 %v874
  %v1075 = vpop.f32.mrb[0].mxu0
  %v1076 = vadd.f32 %v811, %v1075
  %v1077 = vpop.f32.mrb[0].mxu0
  %1078 = vmatprep.mubr.f32.mxu0 0.0
  %1079 = vmatmul.mubr.f32.gmra.mrb[0].mxu0 %v877
  %v1080 = vpop.f32.mrb[0].mxu0
  %v1081 = vadd.f32 %v811, %v1080
  %v1082 = vpop.f32.mrb[0].mxu0
  %1083 = vmatprep.mubr.f32.mxu0 0.0
  %1084 = vmatmul.mubr.f32.gmra.mrb[0].mxu0 %v880
  %v1085 = vpop.f32.mrb[0].mxu0
  %v1086 = vadd.f32 %v811, %v1085
  %v1087 = vpop.f32.mrb[0].mxu0
  %1088 = vmatprep.mubr.f32.mxu0 0.0
  %1089 = vmatmul.mubr.f32.gmra.mrb[0].mxu0 %v883
  %v1090 = vpop.f32.mrb[0].mxu0
  %v1091 = vadd.f32 %v811, %v1090
  %v1092 = vpop.f32.mrb[0].mxu0
  %1093 = vmatprep.mubr.f32.mxu0 0.0
  %1094 = vmatmul.mubr.f32.gmra.mrb[0].mxu0 %v886
  %v1095 = vpop.f32.mrb[0].mxu0
  %v1096 = vadd.f32 %v811, %v1095
  %v1097 = vpop.f32.mrb[0].mxu0
  %1098 = vmatprep.mubr.f32.mxu0 0.0
  %1099 = vmatmul.mubr.f32.gmra.mrb[0].mxu0 %v889
  %v1100 = vpop.f32.mrb[0].mxu0
  %v1101 = vadd.f32 %v811, %v1100
  %v1102 = vpop.f32.mrb[0].mxu0
  %1103 = vmatprep.mubr.f32.mxu0 0.0
  %1104 = vmatmul.mubr.f32.gmra.mrb[0].mxu0 %v892
  %v1105 = vpop.f32.mrb[0].mxu0
  %v1106 = vadd.f32 %v811, %v1105
  %v1107 = vpop.f32.mrb[0].mxu0
  %1108 = vmatprep.mubr.f32.mxu0 0.0
  %1109 = vmatmul.mubr.f32.gmra.mrb[0].mxu0 %v895
  %v1110 = vpop.f32.mrb[0].mxu0
  %v1111 = vadd.f32 %v811, %v1110
  %v1112 = vpop.f32.mrb[0].mxu0
  %1113 = vmatprep.mubr.f32.mxu0 0.0
  %1114 = vmatmul.mubr.f32.gmra.mrb[0].mxu0 %v898
  %v1115 = vpop.f32.mrb[0].mxu0
  %v1116 = vadd.f32 %v811, %v1115
  %v1117 = vpop.f32.mrb[0].mxu0
  %1118 = vmatprep.mubr.f32.mxu0 0.0
  %1119 = vmatmul.mubr.f32.gmra.mrb[0].mxu0 %v901
  %v1120 = vpop.f32.mrb[0].mxu0
  %v1121 = vadd.f32 %v811, %v1120
  %v1122 = vpop.f32.mrb[0].mxu0
  %1123 = vmatprep.mubr.f32.mxu0 0.0
  %1124 = vmatmul.mubr.f32.gmra.mrb[0].mxu0 %v904
  %v1125 = vpop.f32.mrb[0].mxu0
  %v1126 = vadd.f32 %v811, %v1125
  %v1127 = vpop.f32.mrb[0].mxu0
  %1128 = vmatprep.mubr.f32.mxu0 0.0
  %1129 = vmatmul.mubr.f32.gmra.mrb[0].mxu0 %v907
  %v1130 = vpop.f32.mrb[0].mxu0
  %v1131 = vadd.f32 %v811, %v1130
  %v1132 = vpop.f32.mrb[0].mxu0
  %1133 = vdwg.mxu0
  %v1134 = vtanh.pop %v976
  %v1135 = vtanh.pop %v981
  %v1136 = vtanh.pop %v986
  %v1137 = vtanh.pop %v991
  %v1138 = vtanh.pop %v996
  %v1139 = vtanh.pop %v1001
  %v1140 = vtanh.pop %v1006
  %v1141 = vtanh.pop %v1011
  %v1142 = vtanh.pop %v1016
  %v1143 = vtanh.pop %v1021
  %v1144 = vtanh.pop %v1026
  %v1145 = vtanh.pop %v1031
  %v1146 = vtanh.pop %v1036
  %v1147 = vtanh.pop %v1041
  %v1148 = vtanh.pop %v1046
  %v1149 = vtanh.pop %v1051
  %v1150 = vtanh.pop %v1056
  %v1151 = vtanh.pop %v1061
  %v1152 = vtanh.pop %v1066
  %v1153 = vtanh.pop %v1071
  %v1154 = vtanh.pop %v1076
  %v1155 = vtanh.pop %v1081
  %v1156 = vtanh.pop %v1086
  %v1157 = vtanh.pop %v1091
  %v1158 = vtanh.pop %v1096
  %v1159 = vtanh.pop %v1101
  %v1160 = vtanh.pop %v1106
  %v1161 = vtanh.pop %v1111
  %v1162 = vtanh.pop %v1116
  %v1163 = vtanh.pop %v1121
  %v1164 = vtanh.pop %v1126
  %v1165 = vtanh.pop %v1131
  %v1166 = vld [vmem:[%s7] sm:$0xff]
  %v1167 = vld [vmem:[%s7 + $0x8] sm:$0xff]
  %v1168 = vld [vmem:[%s7 + $0x10] sm:$0xff]
  %v1169 = vld [vmem:[%s7 + $0x18] sm:$0xff]
  %v1170 = vld [vmem:[%s7 + $0x20] sm:$0xff]
  %v1171 = vld [vmem:[%s7 + $0x28] sm:$0xff]
  %v1172 = vld [vmem:[%s7 + $0x30] sm:$0xff]
  %v1173 = vld [vmem:[%s7 + $0x38] sm:$0xff]
  %v1174 = vld [vmem:[#allocation2] sm:$0x1]
  %v1176 = vlaneseq
  %v1177 = vshrl.u32 %v1176, 7
  %v1178 = vsub.s32 0, %v1177
  %v1179 = vrot.slane %v1174, %v1178
  %v1182 = vsel %vm444, %v1134, 0
  %v1185 = vsel %vm444, %v1135, 0
  %v1188 = vsel %vm444, %v1136, 0
  %v1191 = vsel %vm444, %v1137, 0
  %v1194 = vsel %vm444, %v1138, 0
  %v1197 = vsel %vm444, %v1139, 0
  %v1200 = vsel %vm444, %v1140, 0
  %v1203 = vsel %vm444, %v1141, 0
  %v1206 = vsel %vm444, %v1142, 0
  %v1209 = vsel %vm444, %v1143, 0
  %v1212 = vsel %vm444, %v1144, 0
  %v1215 = vsel %vm444, %v1145, 0
  %v1218 = vsel %vm444, %v1146, 0
  %v1221 = vsel %vm444, %v1147, 0
  %v1224 = vsel %vm444, %v1148, 0
  %v1227 = vsel %vm444, %v1149, 0
  %v1230 = vsel %vm444, %v1150, 0
  %v1233 = vsel %vm444, %v1151, 0
  %v1236 = vsel %vm444, %v1152, 0
  %v1239 = vsel %vm444, %v1153, 0
  %v1242 = vsel %vm444, %v1154, 0
  %v1245 = vsel %vm444, %v1155, 0
  %v1248 = vsel %vm444, %v1156, 0
  %v1251 = vsel %vm444, %v1157, 0
  %v1254 = vsel %vm444, %v1158, 0
  %v1257 = vsel %vm444, %v1159, 0
  %v1260 = vsel %vm444, %v1160, 0
  %v1263 = vsel %vm444, %v1161, 0
  %v1266 = vsel %vm444, %v1162, 0
  %v1269 = vsel %vm444, %v1163, 0
  %v1272 = vsel %vm444, %v1164, 0
  %v1275 = vsel %vm444, %v1165, 0
  %1277 = vmatprep.subr.mxu0 0.0
  %1278 = vmatpush1.msra.mxu0 %v1166
  %1279 = vmatprep.subr.mxu0 0.0
  %1280 = vmatpush1.msra.mxu0 %v1167
  %1281 = vmatprep.subr.mxu0 0.0
  %1282 = vmatpush1.msra.mxu0 %v1168
  %1283 = vmatprep.subr.mxu0 0.0
  %1284 = vmatpush1.msra.mxu0 %v1169
  %1285 = vmatprep.subr.mxu0 0.0
  %1286 = vmatpush1.msra.mxu0 %v1170
  %1287 = vmatprep.subr.mxu0 0.0
  %1288 = vmatpush1.msra.mxu0 %v1171
  %1289 = vmatprep.subr.mxu0 0.0
  %1290 = vmatpush1.msra.mxu0 %v1172
  %1291 = vmatprep.subr.mxu0 0.0
  %1292 = vmatpush1.msra.mxu0 %v1173
  %1293 = vmatprep.subr.mxu0 0.0
  %1294 = vmatpush1.msra.mxu0 0.0
  %1295 = vmatprep.subr.mxu0 0.0
  %1296 = vmatpush1.msra.mxu0 0.0
  %1297 = vmatprep.subr.mxu0 0.0
  %1298 = vmatpush1.msra.mxu0 0.0
  %1299 = vmatprep.subr.mxu0 0.0
  %1300 = vmatpush1.msra.mxu0 0.0
  %1301 = vmatprep.subr.mxu0 0.0
  %1302 = vmatpush1.msra.mxu0 0.0
  %1303 = vmatprep.subr.mxu0 0.0
  %1304 = vmatpush1.msra.mxu0 0.0
  %1305 = vmatprep.subr.mxu0 0.0
  %1306 = vmatpush1.msra.mxu0 0.0
  %1307 = vmatprep.subr.mxu0 0.0
  %1308 = vmatpush1.msra.mxu0 0.0
  %1309 = vmatprep.subr.mxu0 0.0
  %1310 = vmatpush1.msra.mxu0 0.0
  %1311 = vmatprep.subr.mxu0 0.0
  %1312 = vmatpush1.msra.mxu0 0.0
  %1313 = vmatprep.subr.mxu0 0.0
  %1314 = vmatpush1.msra.mxu0 0.0
  %1315 = vmatprep.subr.mxu0 0.0
  %1316 = vmatpush1.msra.mxu0 0.0
  %1317 = vmatprep.subr.mxu0 0.0
  %1318 = vmatpush1.msra.mxu0 0.0
  %1319 = vmatprep.subr.mxu0 0.0
  %1320 = vmatpush1.msra.mxu0 0.0
  %1321 = vmatprep.subr.mxu0 0.0
  %1322 = vmatpush1.msra.mxu0 0.0
  %1323 = vmatprep.subr.mxu0 0.0
  %1324 = vmatpush1.msra.mxu0 0.0
  %1325 = vmatprep.subr.mxu0 0.0
  %1326 = vmatpush1.msra.mxu0 0.0
  %1327 = vmatprep.subr.mxu0 0.0
  %1328 = vmatpush1.msra.mxu0 0.0
  %1329 = vmatprep.subr.mxu0 0.0
  %1330 = vmatpush1.msra.mxu0 0.0
  %1331 = vmatprep.subr.mxu0 0.0
  %1332 = vmatpush1.msra.mxu0 0.0
  %1333 = vmatprep.subr.mxu0 0.0
  %1334 = vmatpush1.msra.mxu0 0.0
  %1335 = vmatprep.subr.mxu0 0.0
  %1336 = vmatpush1.msra.mxu0 0.0
  %1337 = vmatprep.subr.mxu0 0.0
  %1338 = vmatpush1.msra.mxu0 0.0
  %1339 = vmatprep.subr.mxu0 0.0
  %1340 = vmatpush1.msra.mxu0 0.0
  %1341 = vmatprep.mubr.f32.mxu0 0.0
  %1342 = vmatmul.mubr.f32.gmra.mrb[0].mxu0 %v1182
  %v1343 = vpop.f32.mrb[0].mxu0
  %v1344 = vadd.f32 %v1179, %v1343
  %v1345 = vpop.f32.mrb[0].mxu0
  %1346 = vmatprep.mubr.f32.mxu0 0.0
  %1347 = vmatmul.mubr.f32.gmra.mrb[0].mxu0 %v1185
  %v1348 = vpop.f32.mrb[0].mxu0
  %v1349 = vadd.f32 %v1179, %v1348
  %v1350 = vpop.f32.mrb[0].mxu0
  %1351 = vmatprep.mubr.f32.mxu0 0.0
  %1352 = vmatmul.mubr.f32.gmra.mrb[0].mxu0 %v1188
  %v1353 = vpop.f32.mrb[0].mxu0
  %v1354 = vadd.f32 %v1179, %v1353
  %v1355 = vpop.f32.mrb[0].mxu0
  %1356 = vmatprep.mubr.f32.mxu0 0.0
  %1357 = vmatmul.mubr.f32.gmra.mrb[0].mxu0 %v1191
  %v1358 = vpop.f32.mrb[0].mxu0
  %v1359 = vadd.f32 %v1179, %v1358
  %v1360 = vpop.f32.mrb[0].mxu0
  %1361 = vmatprep.mubr.f32.mxu0 0.0
  %1362 = vmatmul.mubr.f32.gmra.mrb[0].mxu0 %v1194
  %v1363 = vpop.f32.mrb[0].mxu0
  %v1364 = vadd.f32 %v1179, %v1363
  %v1365 = vpop.f32.mrb[0].mxu0
  %1366 = vmatprep.mubr.f32.mxu0 0.0
  %1367 = vmatmul.mubr.f32.gmra.mrb[0].mxu0 %v1197
  %v1368 = vpop.f32.mrb[0].mxu0
  %v1369 = vadd.f32 %v1179, %v1368
  %v1370 = vpop.f32.mrb[0].mxu0
  %1371 = vmatprep.mubr.f32.mxu0 0.0
  %1372 = vmatmul.mubr.f32.gmra.mrb[0].mxu0 %v1200
  %v1373 = vpop.f32.mrb[0].mxu0
  %v1374 = vadd.f32 %v1179, %v1373
  %v1375 = vpop.f32.mrb[0].mxu0
  %1376 = vmatprep.mubr.f32.mxu0 0.0
  %1377 = vmatmul.mubr.f32.gmra.mrb[0].mxu0 %v1203
  %v1378 = vpop.f32.mrb[0].mxu0
  %v1379 = vadd.f32 %v1179, %v1378
  %v1380 = vpop.f32.mrb[0].mxu0
  %1381 = vmatprep.mubr.f32.mxu0 0.0
  %1382 = vmatmul.mubr.f32.gmra.mrb[0].mxu0 %v1206
  %v1383 = vpop.f32.mrb[0].mxu0
  %v1384 = vadd.f32 %v1179, %v1383
  %v1385 = vpop.f32.mrb[0].mxu0
  %1386 = vmatprep.mubr.f32.mxu0 0.0
  %1387 = vmatmul.mubr.f32.gmra.mrb[0].mxu0 %v1209
  %v1388 = vpop.f32.mrb[0].mxu0
  %v1389 = vadd.f32 %v1179, %v1388
  %v1390 = vpop.f32.mrb[0].mxu0
  %1391 = vmatprep.mubr.f32.mxu0 0.0
  %1392 = vmatmul.mubr.f32.gmra.mrb[0].mxu0 %v1212
  %v1393 = vpop.f32.mrb[0].mxu0
  %v1394 = vadd.f32 %v1179, %v1393
  %v1395 = vpop.f32.mrb[0].mxu0
  %1396 = vmatprep.mubr.f32.mxu0 0.0
  %1397 = vmatmul.mubr.f32.gmra.mrb[0].mxu0 %v1215
  %v1398 = vpop.f32.mrb[0].mxu0
  %v1399 = vadd.f32 %v1179, %v1398
  %v1400 = vpop.f32.mrb[0].mxu0
  %1401 = vmatprep.mubr.f32.mxu0 0.0
  %1402 = vmatmul.mubr.f32.gmra.mrb[0].mxu0 %v1218
  %v1403 = vpop.f32.mrb[0].mxu0
  %v1404 = vadd.f32 %v1179, %v1403
  %v1405 = vpop.f32.mrb[0].mxu0
  %1406 = vmatprep.mubr.f32.mxu0 0.0
  %1407 = vmatmul.mubr.f32.gmra.mrb[0].mxu0 %v1221
  %v1408 = vpop.f32.mrb[0].mxu0
  %v1409 = vadd.f32 %v1179, %v1408
  %v1410 = vpop.f32.mrb[0].mxu0
  %1411 = vmatprep.mubr.f32.mxu0 0.0
  %1412 = vmatmul.mubr.f32.gmra.mrb[0].mxu0 %v1224
  %v1413 = vpop.f32.mrb[0].mxu0
  %v1414 = vadd.f32 %v1179, %v1413
  %v1415 = vpop.f32.mrb[0].mxu0
  %1416 = vmatprep.mubr.f32.mxu0 0.0
  %1417 = vmatmul.mubr.f32.gmra.mrb[0].mxu0 %v1227
  %v1418 = vpop.f32.mrb[0].mxu0
  %v1419 = vadd.f32 %v1179, %v1418
  %v1420 = vpop.f32.mrb[0].mxu0
  %1421 = vmatprep.mubr.f32.mxu0 0.0
  %1422 = vmatmul.mubr.f32.gmra.mrb[0].mxu0 %v1230
  %v1423 = vpop.f32.mrb[0].mxu0
  %v1424 = vadd.f32 %v1179, %v1423
  %v1425 = vpop.f32.mrb[0].mxu0
  %1426 = vmatprep.mubr.f32.mxu0 0.0
  %1427 = vmatmul.mubr.f32.gmra.mrb[0].mxu0 %v1233
  %v1428 = vpop.f32.mrb[0].mxu0
  %v1429 = vadd.f32 %v1179, %v1428
  %v1430 = vpop.f32.mrb[0].mxu0
  %1431 = vmatprep.mubr.f32.mxu0 0.0
  %1432 = vmatmul.mubr.f32.gmra.mrb[0].mxu0 %v1236
  %v1433 = vpop.f32.mrb[0].mxu0
  %v1434 = vadd.f32 %v1179, %v1433
  %v1435 = vpop.f32.mrb[0].mxu0
  %1436 = vmatprep.mubr.f32.mxu0 0.0
  %1437 = vmatmul.mubr.f32.gmra.mrb[0].mxu0 %v1239
  %v1438 = vpop.f32.mrb[0].mxu0
  %v1439 = vadd.f32 %v1179, %v1438
  %v1440 = vpop.f32.mrb[0].mxu0
  %1441 = vmatprep.mubr.f32.mxu0 0.0
  %1442 = vmatmul.mubr.f32.gmra.mrb[0].mxu0 %v1242
  %v1443 = vpop.f32.mrb[0].mxu0
  %v1444 = vadd.f32 %v1179, %v1443
  %v1445 = vpop.f32.mrb[0].mxu0
  %1446 = vmatprep.mubr.f32.mxu0 0.0
  %1447 = vmatmul.mubr.f32.gmra.mrb[0].mxu0 %v1245
  %v1448 = vpop.f32.mrb[0].mxu0
  %v1449 = vadd.f32 %v1179, %v1448
  %v1450 = vpop.f32.mrb[0].mxu0
  %1451 = vmatprep.mubr.f32.mxu0 0.0
  %1452 = vmatmul.mubr.f32.gmra.mrb[0].mxu0 %v1248
  %v1453 = vpop.f32.mrb[0].mxu0
  %v1454 = vadd.f32 %v1179, %v1453
  %v1455 = vpop.f32.mrb[0].mxu0
  %1456 = vmatprep.mubr.f32.mxu0 0.0
  %1457 = vmatmul.mubr.f32.gmra.mrb[0].mxu0 %v1251
  %v1458 = vpop.f32.mrb[0].mxu0
  %v1459 = vadd.f32 %v1179, %v1458
  %v1460 = vpop.f32.mrb[0].mxu0
  %1461 = vmatprep.mubr.f32.mxu0 0.0
  %1462 = vmatmul.mubr.f32.gmra.mrb[0].mxu0 %v1254
  %v1463 = vpop.f32.mrb[0].mxu0
  %v1464 = vadd.f32 %v1179, %v1463
  %v1465 = vpop.f32.mrb[0].mxu0
  %1466 = vmatprep.mubr.f32.mxu0 0.0
  %1467 = vmatmul.mubr.f32.gmra.mrb[0].mxu0 %v1257
  %v1468 = vpop.f32.mrb[0].mxu0
  %v1469 = vadd.f32 %v1179, %v1468
  %v1470 = vpop.f32.mrb[0].mxu0
  %1471 = vmatprep.mubr.f32.mxu0 0.0
  %1472 = vmatmul.mubr.f32.gmra.mrb[0].mxu0 %v1260
  %v1473 = vpop.f32.mrb[0].mxu0
  %v1474 = vadd.f32 %v1179, %v1473
  %v1475 = vpop.f32.mrb[0].mxu0
  %1476 = vmatprep.mubr.f32.mxu0 0.0
  %1477 = vmatmul.mubr.f32.gmra.mrb[0].mxu0 %v1263
  %v1478 = vpop.f32.mrb[0].mxu0
  %v1479 = vadd.f32 %v1179, %v1478
  %v1480 = vpop.f32.mrb[0].mxu0
  %1481 = vmatprep.mubr.f32.mxu0 0.0
  %1482 = vmatmul.mubr.f32.gmra.mrb[0].mxu0 %v1266
  %v1483 = vpop.f32.mrb[0].mxu0
  %v1484 = vadd.f32 %v1179, %v1483
  %v1485 = vpop.f32.mrb[0].mxu0
  %1486 = vmatprep.mubr.f32.mxu0 0.0
  %1487 = vmatmul.mubr.f32.gmra.mrb[0].mxu0 %v1269
  %v1488 = vpop.f32.mrb[0].mxu0
  %v1489 = vadd.f32 %v1179, %v1488
  %v1490 = vpop.f32.mrb[0].mxu0
  %1491 = vmatprep.mubr.f32.mxu0 0.0
  %1492 = vmatmul.mubr.f32.gmra.mrb[0].mxu0 %v1272
  %v1493 = vpop.f32.mrb[0].mxu0
  %v1494 = vadd.f32 %v1179, %v1493
  %v1495 = vpop.f32.mrb[0].mxu0
  %1496 = vmatprep.mubr.f32.mxu0 0.0
  %1497 = vmatmul.mubr.f32.gmra.mrb[0].mxu0 %v1275
  %v1498 = vpop.f32.mrb[0].mxu0
  %v1499 = vadd.f32 %v1179, %v1498
  %v1500 = vpop.f32.mrb[0].mxu0
  %1501 = vdwg.mxu0
  %vm1502 = vcmask 7168
  %1503 = vst.msk [vmem:[%s9] sm:$0xff] %vm1502, %v1344
  %1504 = vst.msk [vmem:[%s9 + $0x8] sm:$0xff] %vm1502, %v1349
  %1505 = vst.msk [vmem:[%s9 + $0x10] sm:$0xff] %vm1502, %v1354
  %1506 = vst.msk [vmem:[%s9 + $0x18] sm:$0xff] %vm1502, %v1359
  %1507 = vst.msk [vmem:[%s9 + $0x20] sm:$0xff] %vm1502, %v1364
  %1508 = vst.msk [vmem:[%s9 + $0x28] sm:$0xff] %vm1502, %v1369
  %1509 = vst.msk [vmem:[%s9 + $0x30] sm:$0xff] %vm1502, %v1374
  %1510 = vst.msk [vmem:[%s9 + $0x38] sm:$0xff] %vm1502, %v1379
  %1511 = vst.msk [vmem:[%s9 + $0x40] sm:$0xff] %vm1502, %v1384
  %1512 = vst.msk [vmem:[%s9 + $0x48] sm:$0xff] %vm1502, %v1389
  %1513 = vst.msk [vmem:[%s9 + $0x50] sm:$0xff] %vm1502, %v1394
  %1514 = vst.msk [vmem:[%s9 + $0x58] sm:$0xff] %vm1502, %v1399
  %1515 = vst.msk [vmem:[%s9 + $0x60] sm:$0xff] %vm1502, %v1404
  %1516 = vst.msk [vmem:[%s9 + $0x68] sm:$0xff] %vm1502, %v1409
  %1517 = vst.msk [vmem:[%s9 + $0x70] sm:$0xff] %vm1502, %v1414
  %1518 = vst.msk [vmem:[%s9 + $0x78] sm:$0xff] %vm1502, %v1419
  %1519 = vst.msk [vmem:[%s9 + $0x80] sm:$0xff] %vm1502, %v1424
  %1520 = vst.msk [vmem:[%s9 + $0x88] sm:$0xff] %vm1502, %v1429
  %1521 = vst.msk [vmem:[%s9 + $0x90] sm:$0xff] %vm1502, %v1434
  %1522 = vst.msk [vmem:[%s9 + $0x98] sm:$0xff] %vm1502, %v1439
  %1523 = vst.msk [vmem:[%s9 + $0xa0] sm:$0xff] %vm1502, %v1444
  %1524 = vst.msk [vmem:[%s9 + $0xa8] sm:$0xff] %vm1502, %v1449
  %1525 = vst.msk [vmem:[%s9 + $0xb0] sm:$0xff] %vm1502, %v1454
  %1526 = vst.msk [vmem:[%s9 + $0xb8] sm:$0xff] %vm1502, %v1459
  %1527 = vst.msk [vmem:[%s9 + $0xc0] sm:$0xff] %vm1502, %v1464
  %1528 = vst.msk [vmem:[%s9 + $0xc8] sm:$0xff] %vm1502, %v1469
  %1529 = vst.msk [vmem:[%s9 + $0xd0] sm:$0xff] %vm1502, %v1474
  %1530 = vst.msk [vmem:[%s9 + $0xd8] sm:$0xff] %vm1502, %v1479
  %1531 = vst.msk [vmem:[%s9 + $0xe0] sm:$0xff] %vm1502, %v1484
  %1532 = vst.msk [vmem:[%s9 + $0xe8] sm:$0xff] %vm1502, %v1489
  %1533 = vst.msk [vmem:[%s9 + $0xf0] sm:$0xff] %vm1502, %v1494
  %1534 = vst.msk [vmem:[%s9 + $0xf8] sm:$0xff] %vm1502, %v1499
  // Predicated region
  $region38: #{tpu_custom_call.1} parent=0 // pred_check
    _
  $region39: #{tpu_custom_call.1} parent=0 // pred_check_branch
    %1536 = sbr.rel (0) target = $region41
  $region40: #{tpu_custom_call.1} parent=0 // pred_region
    _
  $region41: #{tpu_custom_call.1} parent=0 // pred_fallthru
    _
  // Predicated region
  $region42: #{tpu_custom_call.1} parent=0 // pred_check
    _
  $region43: #{tpu_custom_call.1} parent=0 // pred_check_branch
    %1538 = sbr.rel (0) target = $region45
  $region44: #{tpu_custom_call.1} parent=0 // pred_region
    _
  $region45: #{tpu_custom_call.1} parent=0 // pred_fallthru
    _

</llo_original>
